<compile_context>
chip_gen: v6e
topology: v6e:2x2x1
jax: 0.10.0
libtpu: 0.0.40
codegen_flags: <defaults>
</compile_context>

<pallas_src>
import functools
import math

import jax
import jax.numpy as jnp
from jax.experimental import pallas as pl
from jax.experimental.pallas import tpu as pltpu

HIDDEN = 32
HID2 = HIDDEN // 2
INFEAT1 = 3
INFEAT2 = 3
INFEAT = INFEAT1 + INFEAT2               # flag_splitfeat=False -> shared 'feat'
INFEAT_PAD = 8                           # feat lanes padded to a sublane multiple
NEIGH_DIM_M = HIDDEN + INFEAT + 1        # [h_src | bit_position | feat_dst]
K = 3                                    # fixed in-degree of every non-PI node
LANES = 128                              # lane-dense padded feature width
E_COL = HIDDEN                           # column holding the folded attn score
F32 = jnp.float32


def _vmem():
    return pl.BlockSpec(memory_space=pltpu.MemorySpace.VMEM)


def _leaky(x, slope):
    return jnp.where(x > 0, x, slope * x)


# ----------------------------- fused Pallas kernel -----------------------------

def _bpn_fused_kernel(*refs, levels, n_pi, po_start, n_po):
    """Whole BPN forward; [h | hw] stays resident in one VMEM scratch."""
    nl = len(levels)
    lvl_refs = [refs[2 * i:2 * i + 2] for i in range(nl)]   # (pred_col, bit_col)
    pos = 2 * nl
    delay_ref, value_ref, feat_ref = refs[pos:pos + 3]; pos += 3
    (w1_ref, b1pi_ref, w2pi_ref, b2pi_ref,
     wh_ref, wb_ref, wf_ref, bm_ref,
     w1o_ref, b1o_ref, w2o_ref, b2o_ref) = refs[pos:pos + 12]; pos += 12
    rst_ref = refs[pos]
    tab_ref = refs[pos + 1]        # (N, 2*LANES): lanes [0:128)=h, [128:256)=hw
    zdst_ref = refs[pos + 2]       # (N, LANES): feat_dst @ W_f + b (folded)

    # NOTE: no full-table memset. Every row a gather can touch (< level start)
    # is written first because the node-id layout is contiguous and 8-aligned;
    # padded lanes (>= HIDDEN) of every written h row are exactly zero, which
    # keeps the folded attention column (E_COL) exact.

    # Destination-side module term for ALL nodes, once (per-level slices later).
    zdst_ref[...] = (jnp.dot(feat_ref[...], wf_ref[...],
                             preferred_element_type=F32) + bm_ref[...])

    # ---- topo level 0: primary inputs (nodes_func_pi) -------------------------
    # mlp_pi layer 1 on [delay | value] as 4 rank-1 VPU broadcast-FMAs (a 4-deep
    # MXU contraction is pure fill/drain).  MLP default negative_slope is 0.1.
    t = b1pi_ref[...] + delay_ref[...] * w1_ref[0:1, :]
    for c in range(3):
        t = t + value_ref[:, c:c + 1] * w1_ref[c + 1:c + 2, :]
    t = _leaky(t, 0.1)
    h_pi = jnp.maximum(jnp.dot(t, w2pi_ref[...], preferred_element_type=F32)
                       + b2pi_ref[...], 0.0)                # activation = LReLU(0)
    tab_ref[0:n_pi, 0:LANES] = h_pi
    # PIs can be module predecessors -> pre-transform hw = h @ W' now.
    tab_ref[0:n_pi, LANES:2 * LANES] = jnp.dot(h_pi, wh_ref[...],
                                               preferred_element_type=F32)

    wb_row = wb_ref[...]                                    # (1, LANES) bit row

    for li, (gs, n_g, ms, n_m) in enumerate(levels):
        pred_ref, bit_ref = lvl_refs[li]
        kn_g, kn_m = K * n_g, K * n_m
        kn = kn_g + kn_m
        c_prev = gs          # predecessors live in rows [0, gs); 8-aligned layout

        # --- ONE fused gate+module gather: one-hot selector over only the
        # already-written rows, contracted against the combined [h | hw] table.
        node = jax.lax.broadcasted_iota(jnp.int32, (kn, c_prev), 1)
        sel = (node == pred_ref[...]).astype(F32)           # (kn, c_prev)
        gat = jnp.dot(sel, tab_ref[0:c_prev, :],
                      preferred_element_type=F32)           # (kn, 2*LANES)

        # --- gate nodes: copy_src('h') -> per-feature smoothmax -> ReLU -------
        mks = [gat[k * n_g:(k + 1) * n_g, 0:LANES] for k in range(K)]
        mmax = mks[0]
        for k in range(1, K):
            mmax = jnp.maximum(mmax, mks[k])
        eks = [jnp.exp(m - mmax) for m in mks]
        esum = eks[0]
        for k in range(1, K):
            esum = esum + eks[k]
        neigh_g = eks[0] * mks[0]
        for k in range(1, K):
            neigh_g = neigh_g + eks[k] * mks[k]
        # padded lanes (>= HIDDEN) are 0 in every source row -> stay exactly 0
        h_gate = jnp.maximum(neigh_g / esum, 0.0)
        tab_ref[gs:gs + n_g, 0:LANES] = h_gate

        # --- module nodes: z gathered pre-transformed from hw, + bit + dst ----
        zdst = zdst_ref[ms:ms + n_m, :]                     # (n_m, LANES)
        zsrc = gat[kn_g:kn, LANES:2 * LANES] + bit_ref[...] * wb_row  # (kn_m, LANES)
        zs, es = [], []
        for k in range(K):
            zk = zsrc[k * n_m:(k + 1) * n_m, :] + zdst      # full linear output
            es.append(_leaky(zk[:, E_COL:E_COL + 1], 0.2))  # e = LReLU_0.2(z @ a_m)
            zs.append(zk)
        emax = es[0]
        for k in range(1, K):
            emax = jnp.maximum(emax, es[k])
        aks = [jnp.exp(e - emax) for e in es]
        asum = aks[0]
        for k in range(1, K):
            asum = asum + aks[k]
        neigh_m = aks[0] * zs[0]
        for k in range(1, K):
            neigh_m = neigh_m + aks[k] * zs[k]
        neigh_m = neigh_m / asum
        lane = jax.lax.broadcasted_iota(jnp.int32, (n_m, LANES), 1)
        h_mod = jnp.where(lane < HIDDEN, jnp.maximum(neigh_m, 0.0), 0.0)
        tab_ref[ms:ms + n_m, 0:LANES] = h_mod

        # Update the resident pre-transform hw = h @ W' for rows that LATER
        # levels can still reference (skip on the last level: no consumers).
        if li < nl - 1:
            blk = tab_ref[gs:gs + n_g + n_m, 0:LANES]       # contiguous read-back
            tab_ref[gs:gs + n_g + n_m, LANES:2 * LANES] = jnp.dot(
                blk, wh_ref[...], preferred_element_type=F32)
        # TODO(synk): width2 (mean bit_position per module) is computed by the
        # torch code but never consumed when flag_width=False, so it is omitted.

    # ---- output: rst = mlp_out(h[POs]); lane-dense (n_po, 128) store ----------
    h_po = tab_ref[po_start:po_start + n_po, 0:LANES]       # POs are contiguous
    t2 = _leaky(jnp.dot(h_po, w1o_ref[...], preferred_element_type=F32)
                + b1o_ref[...], 0.1)
    rst_ref[...] = (jnp.dot(t2, w2o_ref[...], preferred_element_type=F32)
                    + b2o_ref[...])                         # column 0 is the result


# ----------------------------- parameters -----------------------------

def init_linear(key, fan_in, fan_out):
    k1, k2 = jax.random.split(key)
    bound = 1.0 / math.sqrt(fan_in)
    w = jax.random.uniform(k1, (fan_in, fan_out), dtype=F32,
                           minval=-bound, maxval=bound)
    b = jax.random.uniform(k2, (1, fan_out), dtype=F32,
                           minval=-bound, maxval=bound)
    return w, b


def init_params(key):
    ks = jax.random.split(key, 6)
    p = {}
    p['mlp_pi'] = init_linear(ks[0], 4, HID2) + init_linear(ks[1], HID2, HIDDEN)
    p['linear_neigh_module'] = init_linear(ks[2], NEIGH_DIM_M, HIDDEN)
    p['attn_vec_m'] = jax.random.normal(ks[3], (HIDDEN, 1), F32)
    p['mlp_out'] = init_linear(ks[4], HIDDEN, HIDDEN) + init_linear(ks[5], HIDDEN, 1)
    # TODO(synk): mlp_agg / mlp_self / mlp_neigh_* / linear_neigh_gate /
    # attention_vector_g are never touched by forward() with the default flags
    # (attn_choice=1, flag_reverse=flag_path_supervise=False), so not materialized.
    return p


def _pad2(x, rows, cols):
    out = jnp.zeros((rows, cols), F32)
    return out.at[:x.shape[0], :x.shape[1]].set(x.astype(F32))


def prepare_params(p):
    """One-time prep: fold the module attention vector into the edge linear
    (W' = [W | W@a]) and zero-pad every weight so all in-kernel matmul outputs
    and stores are 128-lane dense.  Exactness of the folded column relies on
    padded lanes of weights AND of h being exactly zero."""
    w1p, b1p, w2p, b2p = p['mlp_pi']
    wm, bm = p['linear_neigh_module']
    am = p['attn_vec_m']
    w1o, b1o, w2o, b2o = p['mlp_out']

    w_cat = jnp.concatenate([wm, wm @ am], axis=1)        # (NEIGH_DIM_M, H+1)
    b_cat = jnp.concatenate([bm, bm @ am], axis=1)        # (1, H+1)

    return (
        _pad2(w1p, 8, LANES),                              # mlp_pi L1 rows: delay,v0,v1,v2
        _pad2(b1p, 1, LANES),
        _pad2(w2p, LANES, LANES),
        _pad2(b2p, 1, LANES),
        _pad2(w_cat[0:HIDDEN, :], LANES, LANES),           # module linear, h_src rows
        _pad2(w_cat[HIDDEN:HIDDEN + 1, :], 1, LANES),      # module linear, bit row
        _pad2(w_cat[HIDDEN + 1:NEIGH_DIM_M, :], INFEAT_PAD, LANES),  # feat_dst rows
        _pad2(b_cat, 1, LANES),                            # module bias (+ folded b@a)
        _pad2(w1o, LANES, LANES),
        _pad2(b1o, 1, LANES),
        _pad2(w2o, LANES, LANES),                          # only column 0 real
        _pad2(b2o, 1, LANES),
    )


# ----------------------------- graph -----------------------------

def build_graph(key):
    """Toy netlist with an 8-row-aligned contiguous node-id layout:
       PIs [0,8), level1 gates [8,16) / modules [16,24),
       level2 gates [24,32) / modules [32,40); POs = [32,40)."""
    n_pi = 8
    levels = ((8, 8, 16, 8), (24, 8, 32, 8))   # (gate_start, n_gate, mod_start, n_mod)
    n_nodes = 40
    po_start, n_po = 32, 8

    ks = jax.random.split(key, 9)

    def pred_col(k, n, hi):
        # (n, K) predecessor ids -> neighbour-major (K*n, 1) int32 column
        return jax.random.randint(k, (n, K), 0, hi,
                                  dtype=jnp.int32).T.reshape(K * n, 1)

    level_tables = []
    idx = 0
    for (gs, n_g, ms, n_m) in levels:
        gp = pred_col(ks[idx], n_g, gs); idx += 1
        mp = pred_col(ks[idx], n_m, gs); idx += 1
        bit = jax.random.uniform(ks[idx], (K * n_m, 1), dtype=F32,
                                 minval=0.0, maxval=8.0); idx += 1
        # fused pred column: gate edge rows first, then module edge rows
        level_tables.append((jnp.concatenate([gp, mp], axis=0), bit))

    delay = jax.random.uniform(ks[idx], (n_pi, 1), dtype=F32); idx += 1
    value = jax.random.uniform(ks[idx], (n_pi, 3), dtype=F32); idx += 1
    feat6 = jax.random.normal(ks[idx], (n_nodes, INFEAT), F32); idx += 1
    feat = jnp.zeros((n_nodes, INFEAT_PAD), F32).at[:, :INFEAT].set(feat6)

    return dict(levels=levels, level_tables=tuple(level_tables),
                delay=delay, value=value, feat=feat,
                n_nodes=n_nodes, n_pi=n_pi, po_start=po_start, n_po=n_po)


# ----------------------------- forward wrapper -----------------------------

def make_bpn_forward(levels, n_nodes, n_pi, po_start, n_po):
    nl = len(levels)
    assert n_nodes % 8 == 0 and n_pi % 8 == 0 and n_po % 8 == 0
    kernel = functools.partial(_bpn_fused_kernel, levels=tuple(levels),
                               n_pi=n_pi, po_start=po_start, n_po=n_po)
    n_inputs = 2 * nl + 3 + 12
    fused = pl.pallas_call(
        kernel,
        out_shape=jax.ShapeDtypeStruct((n_po, LANES), F32),   # lane-dense output
        in_specs=[_vmem()] * n_inputs,
        out_specs=_vmem(),
        scratch_shapes=[pltpu.VMEM((n_nodes, 2 * LANES), F32),   # [h | hw] resident
                        pltpu.VMEM((n_nodes, LANES), F32)],      # zdst (feat term)
    )

    @jax.jit
    def forward(level_tables, delay, value, feat, weights):
        flat = []
        for pred, bit in level_tables:
            flat.extend((pred, bit))
        rst_wide = fused(*flat, delay, value, feat, *weights)
        rst = rst_wide[:, 0:1]                 # real scalar output lives in col 0
        prob_sum = jnp.zeros((1,), F32)
        prob_dev = jnp.zeros((1,), F32)
        # TODO(synk): flag_reverse / flag_path_supervise / flag_width branches
        # (prop_backward, prop_delay, mlp_out_new global-feature paths) are dead
        # with the default flags; prob_sum/prob_dev are the torch constants.
        return rst, prob_sum, prob_dev, None

    return forward


if __name__ == "__main__":
    root = jax.random.PRNGKey(0)
    kp, kg = jax.random.split(root)
    params = init_params(kp)
    weights = prepare_params(params)
    graph = build_graph(kg)
    forward = make_bpn_forward(graph['levels'], graph['n_nodes'], graph['n_pi'],
                               graph['po_start'], graph['n_po'])
    rst, prob_sum, prob_dev, crit = forward(graph['level_tables'], graph['delay'],
                                            graph['value'], graph['feat'], weights)
    jax.block_until_ready(rst)
    assert rst.shape == (graph['n_po'], 1) and prob_sum.shape == (1,)
    print("KERNEL_OK")
</pallas_src>

<mosaic_0001>
module attributes {stable_mosaic.version = 11 : i64} {
  func.func @_bpn_fused_kernel(%arg0: memref<48x1xi32, #tpu.memory_space<vmem>>, %arg1: memref<24x1xf32, #tpu.memory_space<vmem>>, %arg2: memref<48x1xi32, #tpu.memory_space<vmem>>, %arg3: memref<24x1xf32, #tpu.memory_space<vmem>>, %arg4: memref<8x1xf32, #tpu.memory_space<vmem>>, %arg5: memref<8x3xf32, #tpu.memory_space<vmem>>, %arg6: memref<40x8xf32, #tpu.memory_space<vmem>>, %arg7: memref<8x128xf32, #tpu.memory_space<vmem>>, %arg8: memref<1x128xf32, #tpu.memory_space<vmem>>, %arg9: memref<128x128xf32, #tpu.memory_space<vmem>>, %arg10: memref<1x128xf32, #tpu.memory_space<vmem>>, %arg11: memref<128x128xf32, #tpu.memory_space<vmem>>, %arg12: memref<1x128xf32, #tpu.memory_space<vmem>>, %arg13: memref<8x128xf32, #tpu.memory_space<vmem>>, %arg14: memref<1x128xf32, #tpu.memory_space<vmem>>, %arg15: memref<128x128xf32, #tpu.memory_space<vmem>>, %arg16: memref<1x128xf32, #tpu.memory_space<vmem>>, %arg17: memref<128x128xf32, #tpu.memory_space<vmem>>, %arg18: memref<1x128xf32, #tpu.memory_space<vmem>>, %arg19: memref<8x128xf32, #tpu.memory_space<vmem>>, %arg20: memref<40x256xf32, #tpu.memory_space<vmem>>, %arg21: memref<40x128xf32, #tpu.memory_space<vmem>>) attributes {dimension_semantics = [], scalar_prefetch = 0 : i64, scratch_operands = 2 : i64, tpu.core_type = #tpu.core_type<tc>} {
    %c0 = arith.constant 0 : index
    %c0_0 = arith.constant 0 : index
    %0 = vector.load %arg6[%c0, %c0_0] : memref<40x8xf32, #tpu.memory_space<vmem>>, vector<40x8xf32>
    %c0_1 = arith.constant 0 : index
    %c0_2 = arith.constant 0 : index
    %1 = vector.load %arg13[%c0_1, %c0_2] : memref<8x128xf32, #tpu.memory_space<vmem>>, vector<8x128xf32>
    %cst = arith.constant dense<0.000000e+00> : vector<40x128xf32>
    %2 = tpu.matmul %0, %1, %cst {dimension_numbers = #tpu.dot_dimension_numbers<[1], [0], [0], [1], [0, 0, 1, 1], [], []>} : vector<40x8xf32>, vector<8x128xf32>, vector<40x128xf32> -> vector<40x128xf32>
    %c0_3 = arith.constant 0 : index
    %c0_4 = arith.constant 0 : index
    %3 = vector.load %arg14[%c0_3, %c0_4] : memref<1x128xf32, #tpu.memory_space<vmem>>, vector<1x128xf32>
    %4 = vector.broadcast %3 : vector<1x128xf32> to vector<40x128xf32>
    %5 = arith.addf %2, %4 : vector<40x128xf32>
    %c0_5 = arith.constant 0 : index
    %c0_6 = arith.constant 0 : index
    %6 = vector.load %arg21[%c0_5, %c0_6] : memref<40x128xf32, #tpu.memory_space<vmem>>, vector<40x128xf32>
    tpu.vector_store %arg21[%c0_5, %c0_6], %5 {strides = array<i32>} : memref<40x128xf32, #tpu.memory_space<vmem>>, vector<40x128xf32>,
    %c0_7 = arith.constant 0 : index
    %c0_8 = arith.constant 0 : index
    %7 = vector.load %arg8[%c0_7, %c0_8] : memref<1x128xf32, #tpu.memory_space<vmem>>, vector<1x128xf32>
    %c0_9 = arith.constant 0 : index
    %c0_10 = arith.constant 0 : index
    %8 = vector.load %arg4[%c0_9, %c0_10] : memref<8x1xf32, #tpu.memory_space<vmem>>, vector<8x1xf32>
    %c0_11 = arith.constant 0 : index
    %c0_12 = arith.constant 0 : index
    %9 = vector.load %arg7[%c0_11, %c0_12] : memref<8x128xf32, #tpu.memory_space<vmem>>, vector<1x128xf32>
    %10 = vector.broadcast %8 : vector<8x1xf32> to vector<8x128xf32>
    %11 = vector.broadcast %9 : vector<1x128xf32> to vector<8x128xf32>
    %12 = arith.mulf %10, %11 : vector<8x128xf32>
    %13 = vector.broadcast %7 : vector<1x128xf32> to vector<8x128xf32>
    %14 = arith.addf %13, %12 : vector<8x128xf32>
    %c0_13 = arith.constant 0 : index
    %c0_14 = arith.constant 0 : index
    %15 = vector.load %arg5[%c0_13, %c0_14] : memref<8x3xf32, #tpu.memory_space<vmem>>, vector<8x1xf32>
    %c1 = arith.constant 1 : index
    %c0_15 = arith.constant 0 : index
    %16 = vector.load %arg7[%c1, %c0_15] : memref<8x128xf32, #tpu.memory_space<vmem>>, vector<1x128xf32>
    %17 = vector.broadcast %15 : vector<8x1xf32> to vector<8x128xf32>
    %18 = vector.broadcast %16 : vector<1x128xf32> to vector<8x128xf32>
    %19 = arith.mulf %17, %18 : vector<8x128xf32>
    %20 = arith.addf %14, %19 : vector<8x128xf32>
    %c0_16 = arith.constant 0 : index
    %c1_17 = arith.constant 1 : index
    %21 = vector.load %arg5[%c0_16, %c1_17] : memref<8x3xf32, #tpu.memory_space<vmem>>, vector<8x1xf32>
    %c2 = arith.constant 2 : index
    %c0_18 = arith.constant 0 : index
    %22 = vector.load %arg7[%c2, %c0_18] : memref<8x128xf32, #tpu.memory_space<vmem>>, vector<1x128xf32>
    %23 = vector.broadcast %21 : vector<8x1xf32> to vector<8x128xf32>
    %24 = vector.broadcast %22 : vector<1x128xf32> to vector<8x128xf32>
    %25 = arith.mulf %23, %24 : vector<8x128xf32>
    %26 = arith.addf %20, %25 : vector<8x128xf32>
    %c0_19 = arith.constant 0 : index
    %c2_20 = arith.constant 2 : index
    %27 = vector.load %arg5[%c0_19, %c2_20] : memref<8x3xf32, #tpu.memory_space<vmem>>, vector<8x1xf32>
    %c3 = arith.constant 3 : index
    %c0_21 = arith.constant 0 : index
    %28 = vector.load %arg7[%c3, %c0_21] : memref<8x128xf32, #tpu.memory_space<vmem>>, vector<1x128xf32>
    %29 = vector.broadcast %27 : vector<8x1xf32> to vector<8x128xf32>
    %30 = vector.broadcast %28 : vector<1x128xf32> to vector<8x128xf32>
    %31 = arith.mulf %29, %30 : vector<8x128xf32>
    %32 = arith.addf %26, %31 : vector<8x128xf32>
    %cst_22 = arith.constant 0.000000e+00 : f32
    %33 = vector.broadcast %cst_22 : f32 to vector<8x128xf32>
    %34 = arith.cmpf ogt, %32, %33 : vector<8x128xf32>
    %cst_23 = arith.constant 1.000000e-01 : f32
    %35 = vector.broadcast %cst_23 : f32 to vector<8x128xf32>
    %36 = arith.mulf %35, %32 : vector<8x128xf32>
    %37 = arith.select %34, %32, %36 : vector<8x128xi1>, vector<8x128xf32>
    %c0_24 = arith.constant 0 : index
    %c0_25 = arith.constant 0 : index
    %38 = vector.load %arg9[%c0_24, %c0_25] : memref<128x128xf32, #tpu.memory_space<vmem>>, vector<128x128xf32>
    %cst_26 = arith.constant dense<0.000000e+00> : vector<8x128xf32>
    %39 = tpu.matmul %37, %38, %cst_26 {dimension_numbers = #tpu.dot_dimension_numbers<[1], [0], [0], [1], [0, 0, 1, 1], [], []>} : vector<8x128xf32>, vector<128x128xf32>, vector<8x128xf32> -> vector<8x128xf32>
    %c0_27 = arith.constant 0 : index
    %c0_28 = arith.constant 0 : index
    %40 = vector.load %arg10[%c0_27, %c0_28] : memref<1x128xf32, #tpu.memory_space<vmem>>, vector<1x128xf32>
    %41 = vector.broadcast %40 : vector<1x128xf32> to vector<8x128xf32>
    %42 = arith.addf %39, %41 : vector<8x128xf32>
    %cst_29 = arith.constant 0.000000e+00 : f32
    %43 = vector.broadcast %cst_29 : f32 to vector<8x128xf32>
    %44 = arith.maximumf %42, %43 : vector<8x128xf32>
    %c0_30 = arith.constant 0 : index
    %c0_31 = arith.constant 0 : index
    %45 = vector.load %arg20[%c0_30, %c0_31] : memref<40x256xf32, #tpu.memory_space<vmem>>, vector<8x128xf32>
    tpu.vector_store %arg20[%c0_30, %c0_31], %44 {strides = array<i32>} : memref<40x256xf32, #tpu.memory_space<vmem>>, vector<8x128xf32>,
    %c0_32 = arith.constant 0 : index
    %c0_33 = arith.constant 0 : index
    %46 = vector.load %arg11[%c0_32, %c0_33] : memref<128x128xf32, #tpu.memory_space<vmem>>, vector<128x128xf32>
    %cst_34 = arith.constant dense<0.000000e+00> : vector<8x128xf32>
    %47 = tpu.matmul %44, %46, %cst_34 {dimension_numbers = #tpu.dot_dimension_numbers<[1], [0], [0], [1], [0, 0, 1, 1], [], []>} : vector<8x128xf32>, vector<128x128xf32>, vector<8x128xf32> -> vector<8x128xf32>
    %c0_35 = arith.constant 0 : index
    %c128 = arith.constant 128 : index
    %48 = vector.load %arg20[%c0_35, %c128] : memref<40x256xf32, #tpu.memory_space<vmem>>, vector<8x128xf32>
    tpu.vector_store %arg20[%c0_35, %c128], %47 {strides = array<i32>} : memref<40x256xf32, #tpu.memory_space<vmem>>, vector<8x128xf32>,
    %c0_36 = arith.constant 0 : index
    %c0_37 = arith.constant 0 : index
    %49 = vector.load %arg12[%c0_36, %c0_37] : memref<1x128xf32, #tpu.memory_space<vmem>>, vector<1x128xf32>
    %50 = tpu.iota {dimensions = array<i32: 1>} : vector<48x8xi32>
    %c0_38 = arith.constant 0 : index
    %c0_39 = arith.constant 0 : index
    %51 = vector.load %arg0[%c0_38, %c0_39] : memref<48x1xi32, #tpu.memory_space<vmem>>, vector<48x1xi32>
    %52 = vector.broadcast %51 : vector<48x1xi32> to vector<48x8xi32>
    %53 = arith.cmpi eq, %50, %52 : vector<48x8xi32>
    %54 = arith.extui %53 : vector<48x8xi1> to vector<48x8xi32>
    %55 = arith.sitofp %54 : vector<48x8xi32> to vector<48x8xf32>
    %c0_40 = arith.constant 0 : index
    %c0_41 = arith.constant 0 : index
    %56 = vector.load %arg20[%c0_40, %c0_41] : memref<40x256xf32, #tpu.memory_space<vmem>>, vector<8x256xf32>
    %cst_42 = arith.constant dense<0.000000e+00> : vector<48x256xf32>
    %57 = tpu.matmul %55, %56, %cst_42 {dimension_numbers = #tpu.dot_dimension_numbers<[1], [0], [0], [1], [0, 0, 1, 1], [], []>} : vector<48x8xf32>, vector<8x256xf32>, vector<48x256xf32> -> vector<48x256xf32>
    %58 = vector.extract_strided_slice %57 {offsets = [0, 0], sizes = [8, 128], strides = [1, 1]} : vector<48x256xf32> to vector<8x128xf32>
    %59 = vector.extract_strided_slice %57 {offsets = [8, 0], sizes = [8, 128], strides = [1, 1]} : vector<48x256xf32> to vector<8x128xf32>
    %60 = vector.extract_strided_slice %57 {offsets = [16, 0], sizes = [8, 128], strides = [1, 1]} : vector<48x256xf32> to vector<8x128xf32>
    %61 = arith.maximumf %58, %59 : vector<8x128xf32>
    %62 = arith.maximumf %61, %60 : vector<8x128xf32>
    %63 = arith.subf %58, %62 : vector<8x128xf32>
    %64 = math.exp %63 : vector<8x128xf32>
    %65 = arith.subf %59, %62 : vector<8x128xf32>
    %66 = math.exp %65 : vector<8x128xf32>
    %67 = arith.subf %60, %62 : vector<8x128xf32>
    %68 = math.exp %67 : vector<8x128xf32>
    %69 = arith.addf %64, %66 : vector<8x128xf32>
    %70 = arith.addf %69, %68 : vector<8x128xf32>
    %71 = arith.mulf %64, %58 : vector<8x128xf32>
    %72 = arith.mulf %66, %59 : vector<8x128xf32>
    %73 = arith.addf %71, %72 : vector<8x128xf32>
    %74 = arith.mulf %68, %60 : vector<8x128xf32>
    %75 = arith.addf %73, %74 : vector<8x128xf32>
    %76 = arith.divf %75, %70 : vector<8x128xf32>
    %cst_43 = arith.constant 0.000000e+00 : f32
    %77 = vector.broadcast %cst_43 : f32 to vector<8x128xf32>
    %78 = arith.maximumf %76, %77 : vector<8x128xf32>
    %c8 = arith.constant 8 : index
    %c0_44 = arith.constant 0 : index
    %79 = vector.load %arg20[%c8, %c0_44] : memref<40x256xf32, #tpu.memory_space<vmem>>, vector<8x128xf32>
    tpu.vector_store %arg20[%c8, %c0_44], %78 {strides = array<i32>} : memref<40x256xf32, #tpu.memory_space<vmem>>, vector<8x128xf32>,
    %c16 = arith.constant 16 : index
    %c0_45 = arith.constant 0 : index
    %80 = vector.load %arg21[%c16, %c0_45] : memref<40x128xf32, #tpu.memory_space<vmem>>, vector<8x128xf32>
    %81 = vector.extract_strided_slice %57 {offsets = [24, 128], sizes = [24, 128], strides = [1, 1]} : vector<48x256xf32> to vector<24x128xf32>
    %c0_46 = arith.constant 0 : index
    %c0_47 = arith.constant 0 : index
    %82 = vector.load %arg1[%c0_46, %c0_47] : memref<24x1xf32, #tpu.memory_space<vmem>>, vector<24x1xf32>
    %83 = vector.broadcast %82 : vector<24x1xf32> to vector<24x128xf32>
    %84 = vector.broadcast %49 : vector<1x128xf32> to vector<24x128xf32>
    %85 = arith.mulf %83, %84 : vector<24x128xf32>
    %86 = arith.addf %81, %85 : vector<24x128xf32>
    %87 = vector.extract_strided_slice %86 {offsets = [0, 0], sizes = [8, 128], strides = [1, 1]} : vector<24x128xf32> to vector<8x128xf32>
    %88 = arith.addf %87, %80 : vector<8x128xf32>
    %89 = vector.extract_strided_slice %88 {offsets = [0, 32], sizes = [8, 1], strides = [1, 1]} : vector<8x128xf32> to vector<8x1xf32>
    %cst_48 = arith.constant 0.000000e+00 : f32
    %90 = vector.broadcast %cst_48 : f32 to vector<8x1xf32>
    %91 = arith.cmpf ogt, %89, %90 : vector<8x1xf32>
    %cst_49 = arith.constant 2.000000e-01 : f32
    %92 = vector.broadcast %cst_49 : f32 to vector<8x1xf32>
    %93 = arith.mulf %92, %89 : vector<8x1xf32>
    %94 = arith.select %91, %89, %93 : vector<8x1xi1>, vector<8x1xf32>
    %95 = vector.extract_strided_slice %86 {offsets = [8, 0], sizes = [8, 128], strides = [1, 1]} : vector<24x128xf32> to vector<8x128xf32>
    %96 = arith.addf %95, %80 : vector<8x128xf32>
    %97 = vector.extract_strided_slice %96 {offsets = [0, 32], sizes = [8, 1], strides = [1, 1]} : vector<8x128xf32> to vector<8x1xf32>
    %cst_50 = arith.constant 0.000000e+00 : f32
    %98 = vector.broadcast %cst_50 : f32 to vector<8x1xf32>
    %99 = arith.cmpf ogt, %97, %98 : vector<8x1xf32>
    %cst_51 = arith.constant 2.000000e-01 : f32
    %100 = vector.broadcast %cst_51 : f32 to vector<8x1xf32>
    %101 = arith.mulf %100, %97 : vector<8x1xf32>
    %102 = arith.select %99, %97, %101 : vector<8x1xi1>, vector<8x1xf32>
    %103 = vector.extract_strided_slice %86 {offsets = [16, 0], sizes = [8, 128], strides = [1, 1]} : vector<24x128xf32> to vector<8x128xf32>
    %104 = arith.addf %103, %80 : vector<8x128xf32>
    %105 = vector.extract_strided_slice %104 {offsets = [0, 32], sizes = [8, 1], strides = [1, 1]} : vector<8x128xf32> to vector<8x1xf32>
    %cst_52 = arith.constant 0.000000e+00 : f32
    %106 = vector.broadcast %cst_52 : f32 to vector<8x1xf32>
    %107 = arith.cmpf ogt, %105, %106 : vector<8x1xf32>
    %cst_53 = arith.constant 2.000000e-01 : f32
    %108 = vector.broadcast %cst_53 : f32 to vector<8x1xf32>
    %109 = arith.mulf %108, %105 : vector<8x1xf32>
    %110 = arith.select %107, %105, %109 : vector<8x1xi1>, vector<8x1xf32>
    %111 = arith.maximumf %94, %102 : vector<8x1xf32>
    %112 = arith.maximumf %111, %110 : vector<8x1xf32>
    %113 = arith.subf %94, %112 : vector<8x1xf32>
    %114 = math.exp %113 : vector<8x1xf32>
    %115 = arith.subf %102, %112 : vector<8x1xf32>
    %116 = math.exp %115 : vector<8x1xf32>
    %117 = arith.subf %110, %112 : vector<8x1xf32>
    %118 = math.exp %117 : vector<8x1xf32>
    %119 = arith.addf %114, %116 : vector<8x1xf32>
    %120 = arith.addf %119, %118 : vector<8x1xf32>
    %121 = vector.broadcast %114 : vector<8x1xf32> to vector<8x128xf32>
    %122 = arith.mulf %121, %88 : vector<8x128xf32>
    %123 = vector.broadcast %116 : vector<8x1xf32> to vector<8x128xf32>
    %124 = arith.mulf %123, %96 : vector<8x128xf32>
    %125 = arith.addf %122, %124 : vector<8x128xf32>
    %126 = vector.broadcast %118 : vector<8x1xf32> to vector<8x128xf32>
    %127 = arith.mulf %126, %104 : vector<8x128xf32>
    %128 = arith.addf %125, %127 : vector<8x128xf32>
    %129 = vector.broadcast %120 : vector<8x1xf32> to vector<8x128xf32>
    %130 = arith.divf %128, %129 : vector<8x128xf32>
    %131 = tpu.iota {dimensions = array<i32: 1>} : vector<8x128xi32>
    %c32_i32 = arith.constant 32 : i32
    %132 = vector.broadcast %c32_i32 : i32 to vector<8x128xi32>
    %133 = arith.cmpi slt, %131, %132 : vector<8x128xi32>
    %cst_54 = arith.constant 0.000000e+00 : f32
    %134 = vector.broadcast %cst_54 : f32 to vector<8x128xf32>
    %135 = arith.maximumf %130, %134 : vector<8x128xf32>
    %cst_55 = arith.constant 0.000000e+00 : f32
    %136 = vector.broadcast %cst_55 : f32 to vector<8x128xf32>
    %137 = arith.select %133, %135, %136 : vector<8x128xi1>, vector<8x128xf32>
    %c16_56 = arith.constant 16 : index
    %c0_57 = arith.constant 0 : index
    %138 = vector.load %arg20[%c16_56, %c0_57] : memref<40x256xf32, #tpu.memory_space<vmem>>, vector<8x128xf32>
    tpu.vector_store %arg20[%c16_56, %c0_57], %137 {strides = array<i32>} : memref<40x256xf32, #tpu.memory_space<vmem>>, vector<8x128xf32>,
    %c8_58 = arith.constant 8 : index
    %c0_59 = arith.constant 0 : index
    %139 = vector.load %arg20[%c8_58, %c0_59] : memref<40x256xf32, #tpu.memory_space<vmem>>, vector<16x128xf32>
    %c0_60 = arith.constant 0 : index
    %c0_61 = arith.constant 0 : index
    %140 = vector.load %arg11[%c0_60, %c0_61] : memref<128x128xf32, #tpu.memory_space<vmem>>, vector<128x128xf32>
    %cst_62 = arith.constant dense<0.000000e+00> : vector<16x128xf32>
    %141 = tpu.matmul %139, %140, %cst_62 {dimension_numbers = #tpu.dot_dimension_numbers<[1], [0], [0], [1], [0, 0, 1, 1], [], []>} : vector<16x128xf32>, vector<128x128xf32>, vector<16x128xf32> -> vector<16x128xf32>
    %c8_63 = arith.constant 8 : index
    %c128_64 = arith.constant 128 : index
    %142 = vector.load %arg20[%c8_63, %c128_64] : memref<40x256xf32, #tpu.memory_space<vmem>>, vector<16x128xf32>
    tpu.vector_store %arg20[%c8_63, %c128_64], %141 {strides = array<i32>} : memref<40x256xf32, #tpu.memory_space<vmem>>, vector<16x128xf32>,
    %143 = tpu.iota {dimensions = array<i32: 1>} : vector<48x24xi32>
    %c0_65 = arith.constant 0 : index
    %c0_66 = arith.constant 0 : index
    %144 = vector.load %arg2[%c0_65, %c0_66] : memref<48x1xi32, #tpu.memory_space<vmem>>, vector<48x1xi32>
    %145 = vector.broadcast %144 : vector<48x1xi32> to vector<48x24xi32>
    %146 = arith.cmpi eq, %143, %145 : vector<48x24xi32>
    %147 = arith.extui %146 : vector<48x24xi1> to vector<48x24xi32>
    %148 = arith.sitofp %147 : vector<48x24xi32> to vector<48x24xf32>
    %c0_67 = arith.constant 0 : index
    %c0_68 = arith.constant 0 : index
    %149 = vector.load %arg20[%c0_67, %c0_68] : memref<40x256xf32, #tpu.memory_space<vmem>>, vector<24x256xf32>
    %cst_69 = arith.constant dense<0.000000e+00> : vector<48x256xf32>
    %150 = tpu.matmul %148, %149, %cst_69 {dimension_numbers = #tpu.dot_dimension_numbers<[1], [0], [0], [1], [0, 0, 1, 1], [], []>} : vector<48x24xf32>, vector<24x256xf32>, vector<48x256xf32> -> vector<48x256xf32>
    %151 = vector.extract_strided_slice %150 {offsets = [0, 0], sizes = [8, 128], strides = [1, 1]} : vector<48x256xf32> to vector<8x128xf32>
    %152 = vector.extract_strided_slice %150 {offsets = [8, 0], sizes = [8, 128], strides = [1, 1]} : vector<48x256xf32> to vector<8x128xf32>
    %153 = vector.extract_strided_slice %150 {offsets = [16, 0], sizes = [8, 128], strides = [1, 1]} : vector<48x256xf32> to vector<8x128xf32>
    %154 = arith.maximumf %151, %152 : vector<8x128xf32>
    %155 = arith.maximumf %154, %153 : vector<8x128xf32>
    %156 = arith.subf %151, %155 : vector<8x128xf32>
    %157 = math.exp %156 : vector<8x128xf32>
    %158 = arith.subf %152, %155 : vector<8x128xf32>
    %159 = math.exp %158 : vector<8x128xf32>
    %160 = arith.subf %153, %155 : vector<8x128xf32>
    %161 = math.exp %160 : vector<8x128xf32>
    %162 = arith.addf %157, %159 : vector<8x128xf32>
    %163 = arith.addf %162, %161 : vector<8x128xf32>
    %164 = arith.mulf %157, %151 : vector<8x128xf32>
    %165 = arith.mulf %159, %152 : vector<8x128xf32>
    %166 = arith.addf %164, %165 : vector<8x128xf32>
    %167 = arith.mulf %161, %153 : vector<8x128xf32>
    %168 = arith.addf %166, %167 : vector<8x128xf32>
    %169 = arith.divf %168, %163 : vector<8x128xf32>
    %cst_70 = arith.constant 0.000000e+00 : f32
    %170 = vector.broadcast %cst_70 : f32 to vector<8x128xf32>
    %171 = arith.maximumf %169, %170 : vector<8x128xf32>
    %c24 = arith.constant 24 : index
    %c0_71 = arith.constant 0 : index
    %172 = vector.load %arg20[%c24, %c0_71] : memref<40x256xf32, #tpu.memory_space<vmem>>, vector<8x128xf32>
    tpu.vector_store %arg20[%c24, %c0_71], %171 {strides = array<i32>} : memref<40x256xf32, #tpu.memory_space<vmem>>, vector<8x128xf32>,
    %c32 = arith.constant 32 : index
    %c0_72 = arith.constant 0 : index
    %173 = vector.load %arg21[%c32, %c0_72] : memref<40x128xf32, #tpu.memory_space<vmem>>, vector<8x128xf32>
    %174 = vector.extract_strided_slice %150 {offsets = [24, 128], sizes = [24, 128], strides = [1, 1]} : vector<48x256xf32> to vector<24x128xf32>
    %c0_73 = arith.constant 0 : index
    %c0_74 = arith.constant 0 : index
    %175 = vector.load %arg3[%c0_73, %c0_74] : memref<24x1xf32, #tpu.memory_space<vmem>>, vector<24x1xf32>
    %176 = vector.broadcast %175 : vector<24x1xf32> to vector<24x128xf32>
    %177 = vector.broadcast %49 : vector<1x128xf32> to vector<24x128xf32>
    %178 = arith.mulf %176, %177 : vector<24x128xf32>
    %179 = arith.addf %174, %178 : vector<24x128xf32>
    %180 = vector.extract_strided_slice %179 {offsets = [0, 0], sizes = [8, 128], strides = [1, 1]} : vector<24x128xf32> to vector<8x128xf32>
    %181 = arith.addf %180, %173 : vector<8x128xf32>
    %182 = vector.extract_strided_slice %181 {offsets = [0, 32], sizes = [8, 1], strides = [1, 1]} : vector<8x128xf32> to vector<8x1xf32>
    %cst_75 = arith.constant 0.000000e+00 : f32
    %183 = vector.broadcast %cst_75 : f32 to vector<8x1xf32>
    %184 = arith.cmpf ogt, %182, %183 : vector<8x1xf32>
    %cst_76 = arith.constant 2.000000e-01 : f32
    %185 = vector.broadcast %cst_76 : f32 to vector<8x1xf32>
    %186 = arith.mulf %185, %182 : vector<8x1xf32>
    %187 = arith.select %184, %182, %186 : vector<8x1xi1>, vector<8x1xf32>
    %188 = vector.extract_strided_slice %179 {offsets = [8, 0], sizes = [8, 128], strides = [1, 1]} : vector<24x128xf32> to vector<8x128xf32>
    %189 = arith.addf %188, %173 : vector<8x128xf32>
    %190 = vector.extract_strided_slice %189 {offsets = [0, 32], sizes = [8, 1], strides = [1, 1]} : vector<8x128xf32> to vector<8x1xf32>
    %cst_77 = arith.constant 0.000000e+00 : f32
    %191 = vector.broadcast %cst_77 : f32 to vector<8x1xf32>
    %192 = arith.cmpf ogt, %190, %191 : vector<8x1xf32>
    %cst_78 = arith.constant 2.000000e-01 : f32
    %193 = vector.broadcast %cst_78 : f32 to vector<8x1xf32>
    %194 = arith.mulf %193, %190 : vector<8x1xf32>
    %195 = arith.select %192, %190, %194 : vector<8x1xi1>, vector<8x1xf32>
    %196 = vector.extract_strided_slice %179 {offsets = [16, 0], sizes = [8, 128], strides = [1, 1]} : vector<24x128xf32> to vector<8x128xf32>
    %197 = arith.addf %196, %173 : vector<8x128xf32>
    %198 = vector.extract_strided_slice %197 {offsets = [0, 32], sizes = [8, 1], strides = [1, 1]} : vector<8x128xf32> to vector<8x1xf32>
    %cst_79 = arith.constant 0.000000e+00 : f32
    %199 = vector.broadcast %cst_79 : f32 to vector<8x1xf32>
    %200 = arith.cmpf ogt, %198, %199 : vector<8x1xf32>
    %cst_80 = arith.constant 2.000000e-01 : f32
    %201 = vector.broadcast %cst_80 : f32 to vector<8x1xf32>
    %202 = arith.mulf %201, %198 : vector<8x1xf32>
    %203 = arith.select %200, %198, %202 : vector<8x1xi1>, vector<8x1xf32>
    %204 = arith.maximumf %187, %195 : vector<8x1xf32>
    %205 = arith.maximumf %204, %203 : vector<8x1xf32>
    %206 = arith.subf %187, %205 : vector<8x1xf32>
    %207 = math.exp %206 : vector<8x1xf32>
    %208 = arith.subf %195, %205 : vector<8x1xf32>
    %209 = math.exp %208 : vector<8x1xf32>
    %210 = arith.subf %203, %205 : vector<8x1xf32>
    %211 = math.exp %210 : vector<8x1xf32>
    %212 = arith.addf %207, %209 : vector<8x1xf32>
    %213 = arith.addf %212, %211 : vector<8x1xf32>
    %214 = vector.broadcast %207 : vector<8x1xf32> to vector<8x128xf32>
    %215 = arith.mulf %214, %181 : vector<8x128xf32>
    %216 = vector.broadcast %209 : vector<8x1xf32> to vector<8x128xf32>
    %217 = arith.mulf %216, %189 : vector<8x128xf32>
    %218 = arith.addf %215, %217 : vector<8x128xf32>
    %219 = vector.broadcast %211 : vector<8x1xf32> to vector<8x128xf32>
    %220 = arith.mulf %219, %197 : vector<8x128xf32>
    %221 = arith.addf %218, %220 : vector<8x128xf32>
    %222 = vector.broadcast %213 : vector<8x1xf32> to vector<8x128xf32>
    %223 = arith.divf %221, %222 : vector<8x128xf32>
    %224 = tpu.iota {dimensions = array<i32: 1>} : vector<8x128xi32>
    %c32_i32_81 = arith.constant 32 : i32
    %225 = vector.broadcast %c32_i32_81 : i32 to vector<8x128xi32>
    %226 = arith.cmpi slt, %224, %225 : vector<8x128xi32>
    %cst_82 = arith.constant 0.000000e+00 : f32
    %227 = vector.broadcast %cst_82 : f32 to vector<8x128xf32>
    %228 = arith.maximumf %223, %227 : vector<8x128xf32>
    %cst_83 = arith.constant 0.000000e+00 : f32
    %229 = vector.broadcast %cst_83 : f32 to vector<8x128xf32>
    %230 = arith.select %226, %228, %229 : vector<8x128xi1>, vector<8x128xf32>
    %c32_84 = arith.constant 32 : index
    %c0_85 = arith.constant 0 : index
    %231 = vector.load %arg20[%c32_84, %c0_85] : memref<40x256xf32, #tpu.memory_space<vmem>>, vector<8x128xf32>
    tpu.vector_store %arg20[%c32_84, %c0_85], %230 {strides = array<i32>} : memref<40x256xf32, #tpu.memory_space<vmem>>, vector<8x128xf32>,
    %c32_86 = arith.constant 32 : index
    %c0_87 = arith.constant 0 : index
    %232 = vector.load %arg20[%c32_86, %c0_87] : memref<40x256xf32, #tpu.memory_space<vmem>>, vector<8x128xf32>
    %c0_88 = arith.constant 0 : index
    %c0_89 = arith.constant 0 : index
    %233 = vector.load %arg15[%c0_88, %c0_89] : memref<128x128xf32, #tpu.memory_space<vmem>>, vector<128x128xf32>
    %cst_90 = arith.constant dense<0.000000e+00> : vector<8x128xf32>
    %234 = tpu.matmul %232, %233, %cst_90 {dimension_numbers = #tpu.dot_dimension_numbers<[1], [0], [0], [1], [0, 0, 1, 1], [], []>} : vector<8x128xf32>, vector<128x128xf32>, vector<8x128xf32> -> vector<8x128xf32>
    %c0_91 = arith.constant 0 : index
    %c0_92 = arith.constant 0 : index
    %235 = vector.load %arg16[%c0_91, %c0_92] : memref<1x128xf32, #tpu.memory_space<vmem>>, vector<1x128xf32>
    %236 = vector.broadcast %235 : vector<1x128xf32> to vector<8x128xf32>
    %237 = arith.addf %234, %236 : vector<8x128xf32>
    %cst_93 = arith.constant 0.000000e+00 : f32
    %238 = vector.broadcast %cst_93 : f32 to vector<8x128xf32>
    %239 = arith.cmpf ogt, %237, %238 : vector<8x128xf32>
    %cst_94 = arith.constant 1.000000e-01 : f32
    %240 = vector.broadcast %cst_94 : f32 to vector<8x128xf32>
    %241 = arith.mulf %240, %237 : vector<8x128xf32>
    %242 = arith.select %239, %237, %241 : vector<8x128xi1>, vector<8x128xf32>
    %c0_95 = arith.constant 0 : index
    %c0_96 = arith.constant 0 : index
    %243 = vector.load %arg17[%c0_95, %c0_96] : memref<128x128xf32, #tpu.memory_space<vmem>>, vector<128x128xf32>
    %cst_97 = arith.constant dense<0.000000e+00> : vector<8x128xf32>
    %244 = tpu.matmul %242, %243, %cst_97 {dimension_numbers = #tpu.dot_dimension_numbers<[1], [0], [0], [1], [0, 0, 1, 1], [], []>} : vector<8x128xf32>, vector<128x128xf32>, vector<8x128xf32> -> vector<8x128xf32>
    %c0_98 = arith.constant 0 : index
    %c0_99 = arith.constant 0 : index
    %245 = vector.load %arg18[%c0_98, %c0_99] : memref<1x128xf32, #tpu.memory_space<vmem>>, vector<1x128xf32>
    %246 = vector.broadcast %245 : vector<1x128xf32> to vector<8x128xf32>
    %247 = arith.addf %244, %246 : vector<8x128xf32>
    %c0_100 = arith.constant 0 : index
    %c0_101 = arith.constant 0 : index
    %248 = vector.load %arg19[%c0_100, %c0_101] : memref<8x128xf32, #tpu.memory_space<vmem>>, vector<8x128xf32>
    tpu.vector_store %arg19[%c0_100, %c0_101], %247 {strides = array<i32>} : memref<8x128xf32, #tpu.memory_space<vmem>>, vector<8x128xf32>,
    return
  }
}

</mosaic_0001>

<llo_original>
// kernel: forward.1
$region0: #{forward.1}
  #allocation0 [shape = 'u32[]', space=smem, size = 0x4, offset = 0x4, fixed_abs, tag = 'smem constant byte address 0x4 - core index']
  #allocation1 [shape = 'u32[144,128]{1,0:T(1,128)}', space=vmem, size = 0x12000, scoped, tag = 'internal scratch']
  #allocation2 [shape = 'f32[40,256]{1,0:T(8,128)}', space=vmem, size = 0xa000, scoped, tag = 'scratch operand']
  #allocation3 [shape = 'f32[40,128]{1,0:T(8,128)}', space=vmem, size = 0x5000, scoped, tag = 'scratch operand']
  %s0 = inlined_call_operand.vmem [shape: s32[48,1], index: 0, kind: input, shape index: {}]
  %s1 = inlined_call_operand.vmem [shape: f32[24,1], index: 1, kind: input, shape index: {}]
  %s2 = inlined_call_operand.vmem [shape: s32[48,1], index: 2, kind: input, shape index: {}]
  %s3 = inlined_call_operand.vmem [shape: f32[24,1], index: 3, kind: input, shape index: {}]
  %s4 = inlined_call_operand.vmem [shape: f32[8,1], index: 4, kind: input, shape index: {}]
  %s5 = inlined_call_operand.vmem [shape: f32[8,3], index: 5, kind: input, shape index: {}]
  %s6 = inlined_call_operand.vmem [shape: f32[40,8], index: 6, kind: input, shape index: {}]
  %s7 = inlined_call_operand.vmem [shape: f32[8,128], index: 7, kind: input, shape index: {}]
  %s8 = inlined_call_operand.vmem [shape: f32[1,128], index: 8, kind: input, shape index: {}]
  %s9 = inlined_call_operand.vmem [shape: f32[128,128], index: 9, kind: input, shape index: {}]
  %s10 = inlined_call_operand.vmem [shape: f32[1,128], index: 10, kind: input, shape index: {}]
  %s11 = inlined_call_operand.hbm [shape: f32[128,128], index: 11, kind: input, shape index: {}]
  %s12 = inlined_call_operand.vmem [shape: f32[1,128], index: 12, kind: input, shape index: {}]
  %s13 = inlined_call_operand.vmem [shape: f32[8,128], index: 13, kind: input, shape index: {}]
  %s14 = inlined_call_operand.vmem [shape: f32[1,128], index: 14, kind: input, shape index: {}]
  %s15 = inlined_call_operand.hbm [shape: f32[128,128], index: 15, kind: input, shape index: {}]
  %s16 = inlined_call_operand.vmem [shape: f32[1,128], index: 16, kind: input, shape index: {}]
  %s17 = inlined_call_operand.hbm [shape: f32[128,128], index: 17, kind: input, shape index: {}]
  %s18 = inlined_call_operand.vmem [shape: f32[1,128], index: 18, kind: input, shape index: {}]
  %s19 = inlined_call_operand.vmem [shape: f32[8,128], index: 19, kind: output, shape index: {}]
  %s20 = sld [smem:[#allocation0]]
  $region98: #{forward.1} parent=0
    _
  %s22 = ssub.s32 1, %s20
  %s23 = scalar_select 0, %s22, %s20
  $region1: #{forward.1} parent=0
    #allocation4 [shape = 'u8[65536]{0}', space=vmem, size = 0x10000, scoped, tag = 'input window, operand 11, single buffered']
    #allocation5 [shape = 's32[1]{0}', space=sflag, size = 0x4, scoped, tag = 'scoped memory for forward.1']
    #allocation6 [shape = 'u8[65536]{0}', space=vmem, size = 0x10000, scoped, tag = 'input window, operand 15, single buffered']
    #allocation7 [shape = 's32[1]{0}', space=sflag, size = 0x4, scoped, tag = 'scoped memory for forward.1']
    #allocation8 [shape = 'u8[65536]{0}', space=vmem, size = 0x10000, scoped, tag = 'input window, operand 17, single buffered']
    %24 = vsyncpa [#allocation5], 0
    %25 = vsyncpa [#allocation7], 0
    // Predicated region
    $region2: #{forward.1} parent=1 // pred_check
      _
    $region3: #{forward.1} parent=1 // pred_check_branch
      %27 = sbr.rel (0) target = $region5
    $region4: #{forward.1} parent=1 // pred_region
      _
    $region5: #{forward.1} parent=1 // pred_fallthru
      _
    // Predicated region
    $region6: #{forward.1} parent=1 // pred_check
      _
    $region7: #{forward.1} parent=1 // pred_check_branch
      %29 = sbr.rel (0) target = $region9
    $region8: #{forward.1} parent=1 // pred_region
      _
    $region9: #{forward.1} parent=1 // pred_fallthru
      _
    // Predicated region
    $region10: #{forward.1} parent=1 // pred_check
      _
    $region11: #{forward.1} parent=1 // pred_check_branch
      %31 = sbr.rel (0) target = $region13
    $region12: #{forward.1} parent=1 // pred_region
      _
    $region13: #{forward.1} parent=1 // pred_fallthru
      _
    // Predicated region
    $region14: #{forward.1} parent=1 // pred_check
      _
    $region15: #{forward.1} parent=1 // pred_check_branch
      %33 = sbr.rel (0) target = $region17
    $region16: #{forward.1} parent=1 // pred_region
      _
    $region17: #{forward.1} parent=1 // pred_fallthru
      _
    // Predicated region
    $region18: #{forward.1} parent=1 // pred_check
      _
    $region19: #{forward.1} parent=1 // pred_check_branch
      %35 = sbr.rel (0) target = $region21
    $region20: #{forward.1} parent=1 // pred_region
      _
    $region21: #{forward.1} parent=1 // pred_fallthru
      _
    // Predicated region
    $region22: #{forward.1} parent=1 // pred_check
      _
    $region23: #{forward.1} parent=1 // pred_check_branch
      %37 = sbr.rel (0) target = $region25
    $region24: #{forward.1} parent=1 // pred_region
      _
    $region25: #{forward.1} parent=1 // pred_fallthru
      _
    // Predicated region
    $region26: #{forward.1} parent=1 // pred_check
      _
    $region27: #{forward.1} parent=1 // pred_check_branch
      %39 = sbr.rel (0) target = $region29
    $region28: #{forward.1} parent=1 // pred_region
      _
    $region29: #{forward.1} parent=1 // pred_fallthru
      _
    // Predicated region
    $region30: #{forward.1} parent=1 // pred_check
      _
    $region31: #{forward.1} parent=1 // pred_check_branch
      %41 = sbr.rel (0) target = $region33
    $region32: #{forward.1} parent=1 // pred_region
      _
    $region33: #{forward.1} parent=1 // pred_fallthru
      _
    // Predicated region
    $region34: #{forward.1} parent=1 // pred_check
      _
    $region35: #{forward.1} parent=1 // pred_check_branch
      %43 = sbr.rel (0) target = $region37
    $region36: #{forward.1} parent=1 // pred_region
      _
    $region37: #{forward.1} parent=1 // pred_fallthru
      _
    // Predicated region
    $region38: #{forward.1} parent=1 // pred_check
      _
    $region39: #{forward.1} parent=1 // pred_check_branch
      %45 = sbr.rel (0) target = $region41
    $region40: #{forward.1} parent=1 // pred_region
      _
    $region41: #{forward.1} parent=1 // pred_fallthru
      _
    // Predicated region
    $region42: #{forward.1} parent=1 // pred_check
      _
    $region43: #{forward.1} parent=1 // pred_check_branch
      %47 = sbr.rel (0) target = $region45
    $region44: #{forward.1} parent=1 // pred_region
      _
    $region45: #{forward.1} parent=1 // pred_fallthru
      _
    // Predicated region
    $region46: #{forward.1} parent=1 // pred_check
      _
    $region47: #{forward.1} parent=1 // pred_check_branch
      %49 = sbr.rel (0) target = $region49
    $region48: #{forward.1} parent=1 // pred_region
      %s51 = ssub.s32 2048, 2048
      %52 = vsyncadd [#allocation5], %s51
      %s53 = sshll.u32 [#allocation4], 4
      %s54 = int_to_ptr.vmem [resolvable:$true] %s53
      %59 = dma.hbm_to_vmem [thread:$0]  %s11, 2048, %s54, [#allocation5], 128, 128, 8
    $region49: #{forward.1} parent=1 // pred_fallthru
      _
    // Predicated region
    $region50: #{forward.1} parent=1 // pred_check
      _
    $region51: #{forward.1} parent=1 // pred_check_branch
      %61 = sbr.rel (0) target = $region53
    $region52: #{forward.1} parent=1 // pred_region
      _
    $region53: #{forward.1} parent=1 // pred_fallthru
      _
    // Predicated region
    $region54: #{forward.1} parent=1 // pred_check
      _
    $region55: #{forward.1} parent=1 // pred_check_branch
      %63 = sbr.rel (0) target = $region57
    $region56: #{forward.1} parent=1 // pred_region
      _
    $region57: #{forward.1} parent=1 // pred_fallthru
      _
    // Predicated region
    $region58: #{forward.1} parent=1 // pred_check
      _
    $region59: #{forward.1} parent=1 // pred_check_branch
      %65 = sbr.rel (0) target = $region61
    $region60: #{forward.1} parent=1 // pred_region
      _
    $region61: #{forward.1} parent=1 // pred_fallthru
      _
    // Predicated region
    $region62: #{forward.1} parent=1 // pred_check
      _
    $region63: #{forward.1} parent=1 // pred_check_branch
      %67 = sbr.rel (0) target = $region65
    $region64: #{forward.1} parent=1 // pred_region
      %s69 = ssub.s32 2048, 2048
      %70 = vsyncadd [#allocation7], %s69
      %s71 = sshll.u32 [#allocation6], 4
      %s72 = int_to_ptr.vmem [resolvable:$true] %s71
      %77 = dma.hbm_to_vmem [thread:$0]  %s15, 2048, %s72, [#allocation7], 128, 128, 8
    $region65: #{forward.1} parent=1 // pred_fallthru
      _
    // Predicated region
    $region66: #{forward.1} parent=1 // pred_check
      _
    $region67: #{forward.1} parent=1 // pred_check_branch
      %79 = sbr.rel (0) target = $region69
    $region68: #{forward.1} parent=1 // pred_region
      _
    $region69: #{forward.1} parent=1 // pred_fallthru
      _
    // Predicated region
    $region70: #{forward.1} parent=1 // pred_check
      _
    $region71: #{forward.1} parent=1 // pred_check_branch
      %81 = sbr.rel (0) target = $region73
    $region72: #{forward.1} parent=1 // pred_region
      %s83 = ssub.s32 2048, 2048
      %84 = vsyncadd [#allocation7], %s83
      %s85 = sshll.u32 [#allocation8], 4
      %s86 = int_to_ptr.vmem [resolvable:$true] %s85
      %91 = dma.hbm_to_vmem [thread:$0]  %s17, 2048, %s86, [#allocation7], 128, 128, 8
    $region73: #{forward.1} parent=1 // pred_fallthru
      _
    // Predicated region
    $region74: #{forward.1} parent=1 // pred_check
      _
    $region75: #{forward.1} parent=1 // pred_check_branch
      %93 = sbr.rel (0) target = $region77
    $region76: #{forward.1} parent=1 // pred_region
      _
    $region77: #{forward.1} parent=1 // pred_fallthru
      _
    // Predicated region
    $region78: #{forward.1} parent=1 // pred_check
      _
    $region79: #{forward.1} parent=1 // pred_check_branch
      %95 = sbr.rel (0) target = $region81
    $region80: #{forward.1} parent=1 // pred_region
      %96 = dma.done [#allocation5], 2048
    $region81: #{forward.1} parent=1 // pred_fallthru
      _
    // Predicated region
    $region82: #{forward.1} parent=1 // pred_check
      _
    $region83: #{forward.1} parent=1 // pred_check_branch
      %98 = sbr.rel (0) target = $region85
    $region84: #{forward.1} parent=1 // pred_region
      %99 = dma.done [#allocation7], 2048
    $region85: #{forward.1} parent=1 // pred_fallthru
      _
    // Predicated region
    $region86: #{forward.1} parent=1 // pred_check
      _
    $region87: #{forward.1} parent=1 // pred_check_branch
      %101 = sbr.rel (0) target = $region89
    $region88: #{forward.1} parent=1 // pred_region
      %102 = dma.done [#allocation7], 2048
    $region89: #{forward.1} parent=1 // pred_fallthru
      _
    %v103 = vld [vmem:[%s6] sm:$0xff]
    %v104 = vld [vmem:[%s6 + $0x8] sm:$0xff]
    %v105 = vld [vmem:[%s6 + $0x10] sm:$0xff]
    %v106 = vld [vmem:[%s6 + $0x18] sm:$0xff]
    %v107 = vld [vmem:[%s6 + $0x20] sm:$0xff]
    %v108 = vld [vmem:[%s13] sm:$0xff]
    %v109 = vld [vmem:[%s14] sm:$0x1]
    %v111 = vlaneseq
    %v112 = vshrl.u32 %v111, 7
    %v113 = vsub.s32 0, %v112
    %v114 = vrot.slane %v109, %v113
    %vm116 = vcmask 64512
    %v118 = vsel %vm116, %v103, 0
    %v121 = vsel %vm116, %v104, 0
    %v124 = vsel %vm116, %v105, 0
    %v127 = vsel %vm116, %v106, 0
    %v130 = vsel %vm116, %v107, 0
    %132 = vmatprep.subr.mxu0 0.0
    %133 = vmatpush1.msra.mxu0 0.0
    %134 = vmatprep.subr.mxu0 0.0
    %135 = vmatpush1.msra.mxu0 0.0
    %136 = vmatprep.subr.mxu0 0.0
    %137 = vmatpush1.msra.mxu0 0.0
    %138 = vmatprep.subr.mxu0 0.0
    %139 = vmatpush1.msra.mxu0 0.0
    %140 = vmatprep.subr.mxu0 0.0
    %141 = vmatpush1.msra.mxu0 0.0
    %142 = vmatprep.subr.mxu0 0.0
    %143 = vmatpush1.msra.mxu0 0.0
    %144 = vmatprep.subr.mxu0 0.0
    %145 = vmatpush1.msra.mxu0 0.0
    %146 = vmatprep.subr.mxu0 0.0
    %147 = vmatpush1.msra.mxu0 0.0
    %148 = vmatprep.subr.mxu0 0.0
    %149 = vmatpush1.msra.mxu0 0.0
    %150 = vmatprep.subr.mxu0 0.0
    %151 = vmatpush1.msra.mxu0 0.0
    %152 = vmatprep.subr.mxu0 0.0
    %153 = vmatpush1.msra.mxu0 0.0
    %154 = vmatprep.subr.mxu0 0.0
    %155 = vmatpush1.msra.mxu0 0.0
    %156 = vmatprep.subr.mxu0 0.0
    %157 = vmatpush1.msra.mxu0 0.0
    %158 = vmatprep.subr.mxu0 0.0
    %159 = vmatpush1.msra.mxu0 0.0
    %160 = vmatprep.subr.mxu0 0.0
    %161 = vmatpush1.msra.mxu0 0.0
    %162 = vmatprep.subr.mxu0 0.0
    %163 = vmatpush1.msra.mxu0 %v108
    %164 = vmatprep.subr.mxu0 0.0
    %165 = vmatpush2.msra.mxu0 0.0
    %166 = vmatprep.subr.mxu0 0.0
    %167 = vmatpush2.msra.mxu0 0.0
    %168 = vmatprep.subr.mxu0 0.0
    %169 = vmatpush2.msra.mxu0 0.0
    %170 = vmatprep.subr.mxu0 0.0
    %171 = vmatpush2.msra.mxu0 0.0
    %172 = vmatprep.subr.mxu0 0.0
    %173 = vmatpush2.msra.mxu0 0.0
    %174 = vmatprep.subr.mxu0 0.0
    %175 = vmatpush2.msra.mxu0 0.0
    %176 = vmatprep.subr.mxu0 0.0
    %177 = vmatpush2.msra.mxu0 0.0
    %178 = vmatprep.subr.mxu0 0.0
    %179 = vmatpush2.msra.mxu0 0.0
    %180 = vmatprep.subr.mxu0 0.0
    %181 = vmatpush2.msra.mxu0 0.0
    %182 = vmatprep.subr.mxu0 0.0
    %183 = vmatpush2.msra.mxu0 0.0
    %184 = vmatprep.subr.mxu0 0.0
    %185 = vmatpush2.msra.mxu0 0.0
    %186 = vmatprep.subr.mxu0 0.0
    %187 = vmatpush2.msra.mxu0 0.0
    %188 = vmatprep.subr.mxu0 0.0
    %189 = vmatpush2.msra.mxu0 0.0
    %190 = vmatprep.subr.mxu0 0.0
    %191 = vmatpush2.msra.mxu0 0.0
    %192 = vmatprep.subr.mxu0 0.0
    %193 = vmatpush2.msra.mxu0 0.0
    %194 = vmatprep.subr.mxu0 0.0
    %195 = vmatpush2.msra.mxu0 0.0
    %196 = vmatprep.mubr.f32.mxu0 0.0
    %197 = vmatmul.mubr.f32.gmra.mxu0 %v118
    %v198 = vpop.f32.mrf.mxu0
    %v199 = vadd.f32 %v114, %v198
    %v200 = vpop.f32.mrf.mxu0
    %201 = vmatprep.mubr.f32.mxu0 0.0
    %202 = vmatmul.mubr.f32.gmra.mxu0 %v121
    %v203 = vpop.f32.mrf.mxu0
    %v204 = vadd.f32 %v114, %v203
    %v205 = vpop.f32.mrf.mxu0
    %206 = vmatprep.mubr.f32.mxu0 0.0
    %207 = vmatmul.mubr.f32.gmra.mxu0 %v124
    %v208 = vpop.f32.mrf.mxu0
    %v209 = vadd.f32 %v114, %v208
    %v210 = vpop.f32.mrf.mxu0
    %211 = vmatprep.mubr.f32.mxu0 0.0
    %212 = vmatmul.mubr.f32.gmra.mxu0 %v127
    %v213 = vpop.f32.mrf.mxu0
    %v214 = vadd.f32 %v114, %v213
    %v215 = vpop.f32.mrf.mxu0
    %216 = vmatprep.mubr.f32.mxu0 0.0
    %217 = vmatmul.mubr.f32.gmra.mxu0 %v130
    %v218 = vpop.f32.mrf.mxu0
    %v219 = vadd.f32 %v114, %v218
    %v220 = vpop.f32.mrf.mxu0
    %221 = vdwg.mxu0
    %222 = vst [vmem:[#allocation3] sm:$0xff] %v199
    %223 = vst [vmem:[#allocation3 + $0x8] sm:$0xff] %v204
    %224 = vst [vmem:[#allocation3 + $0x10] sm:$0xff] %v209
    %225 = vst [vmem:[#allocation3 + $0x18] sm:$0xff] %v214
    %226 = vst [vmem:[#allocation3 + $0x20] sm:$0xff] %v219
    %v227 = vld [vmem:[%s8] sm:$0x1]
    %v228 = vld [vmem:[%s4] sm:$0xff]
    %v229 = vld [vmem:[%s7] sm:$0x1]
    %231 = vset.pattern.permute.xlu0 0
    %232 = vperm.xlu0 %231, %v228
    %v233 = vpop.permute.xlu0 %232
    %v235 = vlaneseq
    %v236 = vshrl.u32 %v235, 7
    %v237 = vsub.s32 0, %v236
    %v238 = vrot.slane %v229, %v237
    %v239 = vmul.f32 %v233, %v238
    %v241 = vlaneseq
    %v242 = vshrl.u32 %v241, 7
    %v243 = vsub.s32 0, %v242
    %v244 = vrot.slane %v227, %v243
    %v246 = vadd.f32 %v244, %v239
    %v247 = vld [vmem:[%s5] sm:$0xff]
    %v248 = vld [vmem:[%s7 + $0x1] sm:$0x1]
    %250 = vset.pattern.permute.xlu0 0
    %251 = vperm.xlu0 %250, %v247
    %v252 = vpop.permute.xlu0 %251
    %v254 = vlaneseq
    %v255 = vshrl.u32 %v254, 7
    %v256 = vsub.s32 0, %v255
    %v257 = vrot.slane %v248, %v256
    %v258 = vmul.f32 %v252, %v257
    %v259 = vadd.f32 %v246, %v258
    %v260 = vld [vmem:[%s7 + $0x2] sm:$0x1]
    %261 = vset.pattern.permute.xlu0 1
    %262 = vperm.xlu0 %261, %v247
    %v263 = vpop.permute.xlu0 %262
    %v265 = vlaneseq
    %v266 = vshrl.u32 %v265, 7
    %v267 = vsub.s32 0, %v266
    %v268 = vrot.slane %v260, %v267
    %v269 = vmul.f32 %v263, %v268
    %v270 = vadd.f32 %v259, %v269
    %v271 = vld [vmem:[%s7 + $0x3] sm:$0x1]
    %272 = vset.pattern.permute.xlu0 2
    %273 = vperm.xlu0 %272, %v247
    %v274 = vpop.permute.xlu0 %273
    %v276 = vlaneseq
    %v277 = vshrl.u32 %v276, 7
    %v278 = vsub.s32 0, %v277
    %v279 = vrot.slane %v271, %v278
    %v280 = vmul.f32 %v274, %v279
    %v281 = vadd.f32 %v270, %v280
    %vm282 = vcmp.gt.f32.partialorder %v281, 0.0
    %v283 = vmul.f32 %v281, 0.1
    %v284 = vsel %vm282, %v281, %v283
    %v285 = vld [vmem:[%s9] sm:$0xff]
    %v286 = vld [vmem:[%s9 + $0x8] sm:$0xff]
    %v287 = vld [vmem:[%s9 + $0x10] sm:$0xff]
    %v288 = vld [vmem:[%s9 + $0x18] sm:$0xff]
    %v289 = vld [vmem:[%s9 + $0x20] sm:$0xff]
    %v290 = vld [vmem:[%s9 + $0x28] sm:$0xff]
    %v291 = vld [vmem:[%s9 + $0x30] sm:$0xff]
    %v292 = vld [vmem:[%s9 + $0x38] sm:$0xff]
    %v293 = vld [vmem:[%s9 + $0x40] sm:$0xff]
    %v294 = vld [vmem:[%s9 + $0x48] sm:$0xff]
    %v295 = vld [vmem:[%s9 + $0x50] sm:$0xff]
    %v296 = vld [vmem:[%s9 + $0x58] sm:$0xff]
    %v297 = vld [vmem:[%s9 + $0x60] sm:$0xff]
    %v298 = vld [vmem:[%s9 + $0x68] sm:$0xff]
    %v299 = vld [vmem:[%s9 + $0x70] sm:$0xff]
    %v300 = vld [vmem:[%s9 + $0x78] sm:$0xff]
    %v301 = vld [vmem:[%s10] sm:$0x1]
    %v303 = vlaneseq
    %v304 = vshrl.u32 %v303, 7
    %v305 = vsub.s32 0, %v304
    %v306 = vrot.slane %v301, %v305
    %308 = vmatprep.subr.mxu0 0.0
    %309 = vmatpush1.msra.mxu0 %v300
    %310 = vmatprep.subr.mxu0 0.0
    %311 = vmatpush1.msra.mxu0 %v299
    %312 = vmatprep.subr.mxu0 0.0
    %313 = vmatpush1.msra.mxu0 %v298
    %314 = vmatprep.subr.mxu0 0.0
    %315 = vmatpush1.msra.mxu0 %v297
    %316 = vmatprep.subr.mxu0 0.0
    %317 = vmatpush1.msra.mxu0 %v296
    %318 = vmatprep.subr.mxu0 0.0
    %319 = vmatpush1.msra.mxu0 %v295
    %320 = vmatprep.subr.mxu0 0.0
    %321 = vmatpush1.msra.mxu0 %v294
    %322 = vmatprep.subr.mxu0 0.0
    %323 = vmatpush1.msra.mxu0 %v293
    %324 = vmatprep.subr.mxu0 0.0
    %325 = vmatpush1.msra.mxu0 %v292
    %326 = vmatprep.subr.mxu0 0.0
    %327 = vmatpush1.msra.mxu0 %v291
    %328 = vmatprep.subr.mxu0 0.0
    %329 = vmatpush1.msra.mxu0 %v290
    %330 = vmatprep.subr.mxu0 0.0
    %331 = vmatpush1.msra.mxu0 %v289
    %332 = vmatprep.subr.mxu0 0.0
    %333 = vmatpush1.msra.mxu0 %v288
    %334 = vmatprep.subr.mxu0 0.0
    %335 = vmatpush1.msra.mxu0 %v287
    %336 = vmatprep.subr.mxu0 0.0
    %337 = vmatpush1.msra.mxu0 %v286
    %338 = vmatprep.subr.mxu0 0.0
    %339 = vmatpush1.msra.mxu0 %v285
    %340 = vmatprep.subr.mxu0 0.0
    %341 = vmatpush2.msra.mxu0 0.0
    %342 = vmatprep.subr.mxu0 0.0
    %343 = vmatpush2.msra.mxu0 0.0
    %344 = vmatprep.subr.mxu0 0.0
    %345 = vmatpush2.msra.mxu0 0.0
    %346 = vmatprep.subr.mxu0 0.0
    %347 = vmatpush2.msra.mxu0 0.0
    %348 = vmatprep.subr.mxu0 0.0
    %349 = vmatpush2.msra.mxu0 0.0
    %350 = vmatprep.subr.mxu0 0.0
    %351 = vmatpush2.msra.mxu0 0.0
    %352 = vmatprep.subr.mxu0 0.0
    %353 = vmatpush2.msra.mxu0 0.0
    %354 = vmatprep.subr.mxu0 0.0
    %355 = vmatpush2.msra.mxu0 0.0
    %356 = vmatprep.subr.mxu0 0.0
    %357 = vmatpush2.msra.mxu0 0.0
    %358 = vmatprep.subr.mxu0 0.0
    %359 = vmatpush2.msra.mxu0 0.0
    %360 = vmatprep.subr.mxu0 0.0
    %361 = vmatpush2.msra.mxu0 0.0
    %362 = vmatprep.subr.mxu0 0.0
    %363 = vmatpush2.msra.mxu0 0.0
    %364 = vmatprep.subr.mxu0 0.0
    %365 = vmatpush2.msra.mxu0 0.0
    %366 = vmatprep.subr.mxu0 0.0
    %367 = vmatpush2.msra.mxu0 0.0
    %368 = vmatprep.subr.mxu0 0.0
    %369 = vmatpush2.msra.mxu0 0.0
    %370 = vmatprep.subr.mxu0 0.0
    %371 = vmatpush2.msra.mxu0 0.0
    %372 = vmatprep.mubr.f32.mxu0 0.0
    %373 = vmatmul.mubr.f32.gmra.mxu0 %v284
    %v374 = vpop.f32.mrf.mxu0
    %v375 = vadd.f32 %v306, %v374
    %v376 = vpop.f32.mrf.mxu0
    %377 = vdwg.mxu0
    %v378 = vmax.f32 %v375, 0.0
    %379 = vst [vmem:[#allocation2] sm:$0xff] %v378
    %v380 = vld [vmem:[#allocation4] sm:$0xff]
    %v381 = vld [vmem:[#allocation4 + $0x8] sm:$0xff]
    %v382 = vld [vmem:[#allocation4 + $0x10] sm:$0xff]
    %v383 = vld [vmem:[#allocation4 + $0x18] sm:$0xff]
    %v384 = vld [vmem:[#allocation4 + $0x20] sm:$0xff]
    %v385 = vld [vmem:[#allocation4 + $0x28] sm:$0xff]
    %v386 = vld [vmem:[#allocation4 + $0x30] sm:$0xff]
    %v387 = vld [vmem:[#allocation4 + $0x38] sm:$0xff]
    %v388 = vld [vmem:[#allocation4 + $0x40] sm:$0xff]
    %v389 = vld [vmem:[#allocation4 + $0x48] sm:$0xff]
    %v390 = vld [vmem:[#allocation4 + $0x50] sm:$0xff]
    %v391 = vld [vmem:[#allocation4 + $0x58] sm:$0xff]
    %v392 = vld [vmem:[#allocation4 + $0x60] sm:$0xff]
    %v393 = vld [vmem:[#allocation4 + $0x68] sm:$0xff]
    %v394 = vld [vmem:[#allocation4 + $0x70] sm:$0xff]
    %v395 = vld [vmem:[#allocation4 + $0x78] sm:$0xff]
    %396 = vmatprep.subr.mxu0 0.0
    %397 = vmatpush1.msra.mxu0 %v395
    %398 = vmatprep.subr.mxu0 0.0
    %399 = vmatpush1.msra.mxu0 %v394
    %400 = vmatprep.subr.mxu0 0.0
    %401 = vmatpush1.msra.mxu0 %v393
    %402 = vmatprep.subr.mxu0 0.0
    %403 = vmatpush1.msra.mxu0 %v392
    %404 = vmatprep.subr.mxu0 0.0
    %405 = vmatpush1.msra.mxu0 %v391
    %406 = vmatprep.subr.mxu0 0.0
    %407 = vmatpush1.msra.mxu0 %v390
    %408 = vmatprep.subr.mxu0 0.0
    %409 = vmatpush1.msra.mxu0 %v389
    %410 = vmatprep.subr.mxu0 0.0
    %411 = vmatpush1.msra.mxu0 %v388
    %412 = vmatprep.subr.mxu0 0.0
    %413 = vmatpush1.msra.mxu0 %v387
    %414 = vmatprep.subr.mxu0 0.0
    %415 = vmatpush1.msra.mxu0 %v386
    %416 = vmatprep.subr.mxu0 0.0
    %417 = vmatpush1.msra.mxu0 %v385
    %418 = vmatprep.subr.mxu0 0.0
    %419 = vmatpush1.msra.mxu0 %v384
    %420 = vmatprep.subr.mxu0 0.0
    %421 = vmatpush1.msra.mxu0 %v383
    %422 = vmatprep.subr.mxu0 0.0
    %423 = vmatpush1.msra.mxu0 %v382
    %424 = vmatprep.subr.mxu0 0.0
    %425 = vmatpush1.msra.mxu0 %v381
    %426 = vmatprep.subr.mxu0 0.0
    %427 = vmatpush1.msra.mxu0 %v380
    %428 = vmatprep.subr.mxu0 0.0
    %429 = vmatpush2.msra.mxu0 0.0
    %430 = vmatprep.subr.mxu0 0.0
    %431 = vmatpush2.msra.mxu0 0.0
    %432 = vmatprep.subr.mxu0 0.0
    %433 = vmatpush2.msra.mxu0 0.0
    %434 = vmatprep.subr.mxu0 0.0
    %435 = vmatpush2.msra.mxu0 0.0
    %436 = vmatprep.subr.mxu0 0.0
    %437 = vmatpush2.msra.mxu0 0.0
    %438 = vmatprep.subr.mxu0 0.0
    %439 = vmatpush2.msra.mxu0 0.0
    %440 = vmatprep.subr.mxu0 0.0
    %441 = vmatpush2.msra.mxu0 0.0
    %442 = vmatprep.subr.mxu0 0.0
    %443 = vmatpush2.msra.mxu0 0.0
    %444 = vmatprep.subr.mxu0 0.0
    %445 = vmatpush2.msra.mxu0 0.0
    %446 = vmatprep.subr.mxu0 0.0
    %447 = vmatpush2.msra.mxu0 0.0
    %448 = vmatprep.subr.mxu0 0.0
    %449 = vmatpush2.msra.mxu0 0.0
    %450 = vmatprep.subr.mxu0 0.0
    %451 = vmatpush2.msra.mxu0 0.0
    %452 = vmatprep.subr.mxu0 0.0
    %453 = vmatpush2.msra.mxu0 0.0
    %454 = vmatprep.subr.mxu0 0.0
    %455 = vmatpush2.msra.mxu0 0.0
    %456 = vmatprep.subr.mxu0 0.0
    %457 = vmatpush2.msra.mxu0 0.0
    %458 = vmatprep.subr.mxu0 0.0
    %459 = vmatpush2.msra.mxu0 0.0
    %460 = vmatprep.mubr.f32.mxu0 0.0
    %461 = vmatmul.mubr.f32.gmra.mxu0 %v378
    %v462 = vpop.f32.mrf.mxu0
    %v463 = vadd.f32 0.0, %v462
    %v464 = vpop.f32.mrf.mxu0
    %465 = vdwg.mxu0
    %466 = vst [vmem:[#allocation2 + $0x8] sm:$0xff] %v463
    %v467 = vld [vmem:[%s12] sm:$0x1]
    %v468 = vlaneseq
    %v469 = vand.u32 %v468, 127
    %v470 = vld [vmem:[%s0] sm:$0xff]
    %v471 = vld [vmem:[%s0 + $0x8] sm:$0xff]
    %v472 = vld [vmem:[%s0 + $0x10] sm:$0xff]
    %v473 = vld [vmem:[%s0 + $0x18] sm:$0xff]
    %v474 = vld [vmem:[%s0 + $0x20] sm:$0xff]
    %v475 = vld [vmem:[%s0 + $0x28] sm:$0xff]
    %476 = vset.pattern.permute.xlu0 0
    %477 = vperm.xlu0 %476, %v470
    %v478 = vpop.permute.xlu0 %477
    %479 = vset.pattern.permute.xlu0 0
    %480 = vperm.xlu0 %479, %v471
    %v481 = vpop.permute.xlu0 %480
    %482 = vset.pattern.permute.xlu0 0
    %483 = vperm.xlu0 %482, %v472
    %v484 = vpop.permute.xlu0 %483
    %485 = vset.pattern.permute.xlu0 0
    %486 = vperm.xlu0 %485, %v473
    %v487 = vpop.permute.xlu0 %486
    %488 = vset.pattern.permute.xlu0 0
    %489 = vperm.xlu0 %488, %v474
    %v490 = vpop.permute.xlu0 %489
    %491 = vset.pattern.permute.xlu0 0
    %492 = vperm.xlu0 %491, %v475
    %v493 = vpop.permute.xlu0 %492
    %vm494 = vcmp.eq.s32.totalorder %v469, %v478
    %vm495 = vcmp.eq.s32.totalorder %v469, %v481
    %vm496 = vcmp.eq.s32.totalorder %v469, %v484
    %vm497 = vcmp.eq.s32.totalorder %v469, %v487
    %vm498 = vcmp.eq.s32.totalorder %v469, %v490
    %vm499 = vcmp.eq.s32.totalorder %v469, %v493
    %v500 = vsel %vm494, 1, 0
    %v501 = vsel %vm495, 1, 0
    %v502 = vsel %vm496, 1, 0
    %v503 = vsel %vm497, 1, 0
    %v504 = vsel %vm498, 1, 0
    %v505 = vsel %vm499, 1, 0
    %v506 = vcvt.s32.f32 %v500
    %v507 = vcvt.s32.f32 %v501
    %v508 = vcvt.s32.f32 %v502
    %v509 = vcvt.s32.f32 %v503
    %v510 = vcvt.s32.f32 %v504
    %v511 = vcvt.s32.f32 %v505
    %v512 = vld [vmem:[#allocation2] sm:$0xff]
    %v513 = vld [vmem:[#allocation2 + $0x8] sm:$0xff]
    %v515 = vsel %vm116, %v506, 0
    %v518 = vsel %vm116, %v507, 0
    %v521 = vsel %vm116, %v508, 0
    %v524 = vsel %vm116, %v509, 0
    %v527 = vsel %vm116, %v510, 0
    %v530 = vsel %vm116, %v511, 0
    %532 = vmatprep.subr.mxu0 0.0
    %533 = vmatpush1.msra.mxu0 0.0
    %534 = vmatprep.subr.mxu0 0.0
    %535 = vmatpush1.msra.mxu0 0.0
    %536 = vmatprep.subr.mxu0 0.0
    %537 = vmatpush1.msra.mxu0 0.0
    %538 = vmatprep.subr.mxu0 0.0
    %539 = vmatpush1.msra.mxu0 0.0
    %540 = vmatprep.subr.mxu0 0.0
    %541 = vmatpush1.msra.mxu0 0.0
    %542 = vmatprep.subr.mxu0 0.0
    %543 = vmatpush1.msra.mxu0 0.0
    %544 = vmatprep.subr.mxu0 0.0
    %545 = vmatpush1.msra.mxu0 0.0
    %546 = vmatprep.subr.mxu0 0.0
    %547 = vmatpush1.msra.mxu0 0.0
    %548 = vmatprep.subr.mxu0 0.0
    %549 = vmatpush1.msra.mxu0 0.0
    %550 = vmatprep.subr.mxu0 0.0
    %551 = vmatpush1.msra.mxu0 0.0
    %552 = vmatprep.subr.mxu0 0.0
    %553 = vmatpush1.msra.mxu0 0.0
    %554 = vmatprep.subr.mxu0 0.0
    %555 = vmatpush1.msra.mxu0 0.0
    %556 = vmatprep.subr.mxu0 0.0
    %557 = vmatpush1.msra.mxu0 0.0
    %558 = vmatprep.subr.mxu0 0.0
    %559 = vmatpush1.msra.mxu0 0.0
    %560 = vmatprep.subr.mxu0 0.0
    %561 = vmatpush1.msra.mxu0 0.0
    %562 = vmatprep.subr.mxu0 %v513
    %563 = vmatpush1.msra.mxu0 %v512
    %564 = vmatprep.subr.mxu0 0.0
    %565 = vmatpush2.msra.mxu0 0.0
    %566 = vmatprep.subr.mxu0 0.0
    %567 = vmatpush2.msra.mxu0 0.0
    %568 = vmatprep.subr.mxu0 0.0
    %569 = vmatpush2.msra.mxu0 0.0
    %570 = vmatprep.subr.mxu0 0.0
    %571 = vmatpush2.msra.mxu0 0.0
    %572 = vmatprep.subr.mxu0 0.0
    %573 = vmatpush2.msra.mxu0 0.0
    %574 = vmatprep.subr.mxu0 0.0
    %575 = vmatpush2.msra.mxu0 0.0
    %576 = vmatprep.subr.mxu0 0.0
    %577 = vmatpush2.msra.mxu0 0.0
    %578 = vmatprep.subr.mxu0 0.0
    %579 = vmatpush2.msra.mxu0 0.0
    %580 = vmatprep.subr.mxu0 0.0
    %581 = vmatpush2.msra.mxu0 0.0
    %582 = vmatprep.subr.mxu0 0.0
    %583 = vmatpush2.msra.mxu0 0.0
    %584 = vmatprep.subr.mxu0 0.0
    %585 = vmatpush2.msra.mxu0 0.0
    %586 = vmatprep.subr.mxu0 0.0
    %587 = vmatpush2.msra.mxu0 0.0
    %588 = vmatprep.subr.mxu0 0.0
    %589 = vmatpush2.msra.mxu0 0.0
    %590 = vmatprep.subr.mxu0 0.0
    %591 = vmatpush2.msra.mxu0 0.0
    %592 = vmatprep.subr.mxu0 0.0
    %593 = vmatpush2.msra.mxu0 0.0
    %594 = vmatprep.subr.mxu0 0.0
    %595 = vmatpush2.msra.mxu0 0.0
    %596 = vmatprep.mubr.f32.mxu0 0.0
    %597 = vmatmul.mubr.f32.gmra.mxu0 %v515
    %v598 = vpop.f32.mrf.mxu0
    %v599 = vadd.f32 0.0, %v598
    %v600 = vpop.f32.mrf.mxu0
    %601 = vmatprep.mubr.f32.mxu0 0.0
    %602 = vmatmul.mubr.f32.gmra.mxu0 %v518
    %v603 = vpop.f32.mrf.mxu0
    %v604 = vadd.f32 0.0, %v603
    %v605 = vpop.f32.mrf.mxu0
    %606 = vmatprep.mubr.f32.mxu0 0.0
    %607 = vmatmul.mubr.f32.gmra.mxu0 %v521
    %v608 = vpop.f32.mrf.mxu0
    %v609 = vadd.f32 0.0, %v608
    %v610 = vpop.f32.mrf.mxu0
    %611 = vmatprep.mubr.f32.mxu0 0.0
    %612 = vmatmul.mubr.f32.gmra.mxu0 %v524
    %v613 = vpop.f32.mrf.mxu0
    %v614 = vpop.f32.mrf.mxu0
    %v615 = vadd.f32 0.0, %v614
    %616 = vmatprep.mubr.f32.mxu0 0.0
    %617 = vmatmul.mubr.f32.gmra.mxu0 %v527
    %v618 = vpop.f32.mrf.mxu0
    %v619 = vpop.f32.mrf.mxu0
    %v620 = vadd.f32 0.0, %v619
    %621 = vmatprep.mubr.f32.mxu0 0.0
    %622 = vmatmul.mubr.f32.gmra.mxu0 %v530
    %v623 = vpop.f32.mrf.mxu0
    %v624 = vpop.f32.mrf.mxu0
    %v625 = vadd.f32 0.0, %v624
    %626 = vdwg.mxu0
    %v627 = vmax.f32 %v599, %v604
    %v628 = vmax.f32 %v627, %v609
    %v629 = vsub.f32 %v599, %v628
    %v630 = vmul.f32 %v629, 1.442695
    %v631 = vpow.pop %v630
    %v632 = vsub.f32 %v604, %v628
    %v633 = vmul.f32 %v632, 1.442695
    %v634 = vpow.pop %v633
    %v635 = vsub.f32 %v609, %v628
    %v636 = vmul.f32 %v635, 1.442695
    %v637 = vpow.pop %v636
    %v638 = vadd.f32 %v631, %v634
    %v639 = vadd.f32 %v638, %v637
    %v640 = vmul.f32 %v631, %v599
    %v641 = vmul.f32 %v634, %v604
    %v642 = vadd.f32 %v640, %v641
    %v643 = vmul.f32 %v637, %v609
    %v644 = vadd.f32 %v642, %v643
    %v645 = vrcp.pop %v639
    %v646 = vmul.f32 %v644, %v645
    %v647 = vmax.f32 %v646, 0.0
    %648 = vst [vmem:[#allocation2 + $0x10] sm:$0xff] %v647
    %v649 = vld [vmem:[#allocation3 + $0x10] sm:$0xff]
    %v650 = vld [vmem:[%s1] sm:$0xff]
    %v651 = vld [vmem:[%s1 + $0x8] sm:$0xff]
    %v652 = vld [vmem:[%s1 + $0x10] sm:$0xff]
    %654 = vset.pattern.permute.xlu0 0
    %655 = vperm.xlu0 %654, %v650
    %v656 = vpop.permute.xlu0 %655
    %659 = vset.pattern.permute.xlu0 0
    %660 = vperm.xlu0 %659, %v651
    %v661 = vpop.permute.xlu0 %660
    %664 = vset.pattern.permute.xlu0 0
    %665 = vperm.xlu0 %664, %v652
    %v666 = vpop.permute.xlu0 %665
    %v669 = vlaneseq
    %v670 = vshrl.u32 %v669, 7
    %v671 = vsub.s32 0, %v670
    %v672 = vrot.slane %v467, %v671
    %v674 = vmul.f32 %v656, %v672
    %v675 = vmul.f32 %v661, %v672
    %v676 = vmul.f32 %v666, %v672
    %v677 = vadd.f32 %v615, %v674
    %v678 = vadd.f32 %v620, %v675
    %v679 = vadd.f32 %v625, %v676
    %v680 = vadd.f32 %v677, %v649
    %vm681 = vcmp.gt.f32.partialorder %v680, 0.0
    %v682 = vmul.f32 %v680, 0.2
    %v683 = vsel %vm681, %v680, %v682
    %v684 = vadd.f32 %v678, %v649
    %vm685 = vcmp.gt.f32.partialorder %v684, 0.0
    %v686 = vmul.f32 %v684, 0.2
    %v687 = vsel %vm685, %v684, %v686
    %v688 = vadd.f32 %v679, %v649
    %vm689 = vcmp.gt.f32.partialorder %v688, 0.0
    %v690 = vmul.f32 %v688, 0.2
    %v691 = vsel %vm689, %v688, %v690
    %v692 = vmax.f32 %v683, %v687
    %v693 = vmax.f32 %v692, %v691
    %v694 = vsub.f32 %v683, %v693
    %v695 = vmul.f32 %v694, 1.442695
    %v696 = vpow.pop %v695
    %v697 = vsub.f32 %v687, %v693
    %v698 = vmul.f32 %v697, 1.442695
    %v699 = vpow.pop %v698
    %v700 = vsub.f32 %v691, %v693
    %v701 = vmul.f32 %v700, 1.442695
    %v702 = vpow.pop %v701
    %v703 = vadd.f32 %v696, %v699
    %v704 = vadd.f32 %v703, %v702
    %706 = vset.pattern.permute.xlu0 32
    %707 = vperm.xlu0 %706, %v696
    %v708 = vpop.permute.xlu0 %707
    %v710 = vmul.f32 %v708, %v680
    %712 = vset.pattern.permute.xlu0 32
    %713 = vperm.xlu0 %712, %v699
    %v714 = vpop.permute.xlu0 %713
    %v716 = vmul.f32 %v714, %v684
    %v717 = vadd.f32 %v710, %v716
    %719 = vset.pattern.permute.xlu0 32
    %720 = vperm.xlu0 %719, %v702
    %v721 = vpop.permute.xlu0 %720
    %v723 = vmul.f32 %v721, %v688
    %v724 = vadd.f32 %v717, %v723
    %726 = vset.pattern.permute.xlu0 32
    %727 = vperm.xlu0 %726, %v704
    %v728 = vpop.permute.xlu0 %727
    %v730 = vrcp.pop %v728
    %v731 = vmul.f32 %v724, %v730
    %vm732 = vcmp.lt.s32.totalorder %v469, 32
    %v733 = vmax.f32 %v731, 0.0
    %v734 = vsel %vm732, %v733, 0.0
    %735 = vst [vmem:[#allocation2 + $0x20] sm:$0xff] %v734
    %v736 = vld [vmem:[#allocation2 + $0x10] sm:$0xff]
    %v737 = vld [vmem:[#allocation2 + $0x20] sm:$0xff]
    %v738 = vld [vmem:[#allocation4] sm:$0xff]
    %v739 = vld [vmem:[#allocation4 + $0x8] sm:$0xff]
    %v740 = vld [vmem:[#allocation4 + $0x10] sm:$0xff]
    %v741 = vld [vmem:[#allocation4 + $0x18] sm:$0xff]
    %v742 = vld [vmem:[#allocation4 + $0x20] sm:$0xff]
    %v743 = vld [vmem:[#allocation4 + $0x28] sm:$0xff]
    %v744 = vld [vmem:[#allocation4 + $0x30] sm:$0xff]
    %v745 = vld [vmem:[#allocation4 + $0x38] sm:$0xff]
    %v746 = vld [vmem:[#allocation4 + $0x40] sm:$0xff]
    %v747 = vld [vmem:[#allocation4 + $0x48] sm:$0xff]
    %v748 = vld [vmem:[#allocation4 + $0x50] sm:$0xff]
    %v749 = vld [vmem:[#allocation4 + $0x58] sm:$0xff]
    %v750 = vld [vmem:[#allocation4 + $0x60] sm:$0xff]
    %v751 = vld [vmem:[#allocation4 + $0x68] sm:$0xff]
    %v752 = vld [vmem:[#allocation4 + $0x70] sm:$0xff]
    %v753 = vld [vmem:[#allocation4 + $0x78] sm:$0xff]
    %754 = vmatprep.subr.mxu0 0.0
    %755 = vmatpush1.msra.mxu0 %v753
    %756 = vmatprep.subr.mxu0 0.0
    %757 = vmatpush1.msra.mxu0 %v752
    %758 = vmatprep.subr.mxu0 0.0
    %759 = vmatpush1.msra.mxu0 %v751
    %760 = vmatprep.subr.mxu0 0.0
    %761 = vmatpush1.msra.mxu0 %v750
    %762 = vmatprep.subr.mxu0 0.0
    %763 = vmatpush1.msra.mxu0 %v749
    %764 = vmatprep.subr.mxu0 0.0
    %765 = vmatpush1.msra.mxu0 %v748
    %766 = vmatprep.subr.mxu0 0.0
    %767 = vmatpush1.msra.mxu0 %v747
    %768 = vmatprep.subr.mxu0 0.0
    %769 = vmatpush1.msra.mxu0 %v746
    %770 = vmatprep.subr.mxu0 0.0
    %771 = vmatpush1.msra.mxu0 %v745
    %772 = vmatprep.subr.mxu0 0.0
    %773 = vmatpush1.msra.mxu0 %v744
    %774 = vmatprep.subr.mxu0 0.0
    %775 = vmatpush1.msra.mxu0 %v743
    %776 = vmatprep.subr.mxu0 0.0
    %777 = vmatpush1.msra.mxu0 %v742
    %778 = vmatprep.subr.mxu0 0.0
    %779 = vmatpush1.msra.mxu0 %v741
    %780 = vmatprep.subr.mxu0 0.0
    %781 = vmatpush1.msra.mxu0 %v740
    %782 = vmatprep.subr.mxu0 0.0
    %783 = vmatpush1.msra.mxu0 %v739
    %784 = vmatprep.subr.mxu0 0.0
    %785 = vmatpush1.msra.mxu0 %v738
    %786 = vmatprep.subr.mxu0 0.0
    %787 = vmatpush2.msra.mxu0 0.0
    %788 = vmatprep.subr.mxu0 0.0
    %789 = vmatpush2.msra.mxu0 0.0
    %790 = vmatprep.subr.mxu0 0.0
    %791 = vmatpush2.msra.mxu0 0.0
    %792 = vmatprep.subr.mxu0 0.0
    %793 = vmatpush2.msra.mxu0 0.0
    %794 = vmatprep.subr.mxu0 0.0
    %795 = vmatpush2.msra.mxu0 0.0
    %796 = vmatprep.subr.mxu0 0.0
    %797 = vmatpush2.msra.mxu0 0.0
    %798 = vmatprep.subr.mxu0 0.0
    %799 = vmatpush2.msra.mxu0 0.0
    %800 = vmatprep.subr.mxu0 0.0
    %801 = vmatpush2.msra.mxu0 0.0
    %802 = vmatprep.subr.mxu0 0.0
    %803 = vmatpush2.msra.mxu0 0.0
    %804 = vmatprep.subr.mxu0 0.0
    %805 = vmatpush2.msra.mxu0 0.0
    %806 = vmatprep.subr.mxu0 0.0
    %807 = vmatpush2.msra.mxu0 0.0
    %808 = vmatprep.subr.mxu0 0.0
    %809 = vmatpush2.msra.mxu0 0.0
    %810 = vmatprep.subr.mxu0 0.0
    %811 = vmatpush2.msra.mxu0 0.0
    %812 = vmatprep.subr.mxu0 0.0
    %813 = vmatpush2.msra.mxu0 0.0
    %814 = vmatprep.subr.mxu0 0.0
    %815 = vmatpush2.msra.mxu0 0.0
    %816 = vmatprep.subr.mxu0 0.0
    %817 = vmatpush2.msra.mxu0 0.0
    %818 = vmatprep.mubr.f32.mxu0 0.0
    %819 = vmatmul.mubr.f32.gmra.mxu0 %v736
    %v820 = vpop.f32.mrf.mxu0
    %v821 = vadd.f32 0.0, %v820
    %v822 = vpop.f32.mrf.mxu0
    %823 = vmatprep.mubr.f32.mxu0 0.0
    %824 = vmatmul.mubr.f32.gmra.mxu0 %v737
    %v825 = vpop.f32.mrf.mxu0
    %v826 = vadd.f32 0.0, %v825
    %v827 = vpop.f32.mrf.mxu0
    %828 = vdwg.mxu0
    %829 = vst [vmem:[#allocation2 + $0x18] sm:$0xff] %v821
    %830 = vst [vmem:[#allocation2 + $0x28] sm:$0xff] %v826
    %v831 = vld [vmem:[%s2] sm:$0xff]
    %v832 = vld [vmem:[%s2 + $0x8] sm:$0xff]
    %v833 = vld [vmem:[%s2 + $0x10] sm:$0xff]
    %v834 = vld [vmem:[%s2 + $0x18] sm:$0xff]
    %v835 = vld [vmem:[%s2 + $0x20] sm:$0xff]
    %v836 = vld [vmem:[%s2 + $0x28] sm:$0xff]
    %837 = vset.pattern.permute.xlu0 0
    %838 = vperm.xlu0 %837, %v831
    %v839 = vpop.permute.xlu0 %838
    %840 = vset.pattern.permute.xlu0 0
    %841 = vperm.xlu0 %840, %v832
    %v842 = vpop.permute.xlu0 %841
    %843 = vset.pattern.permute.xlu0 0
    %844 = vperm.xlu0 %843, %v833
    %v845 = vpop.permute.xlu0 %844
    %846 = vset.pattern.permute.xlu0 0
    %847 = vperm.xlu0 %846, %v834
    %v848 = vpop.permute.xlu0 %847
    %849 = vset.pattern.permute.xlu0 0
    %850 = vperm.xlu0 %849, %v835
    %v851 = vpop.permute.xlu0 %850
    %852 = vset.pattern.permute.xlu0 0
    %853 = vperm.xlu0 %852, %v836
    %v854 = vpop.permute.xlu0 %853
    %vm855 = vcmp.eq.s32.totalorder %v469, %v839
    %vm856 = vcmp.eq.s32.totalorder %v469, %v842
    %vm857 = vcmp.eq.s32.totalorder %v469, %v845
    %vm858 = vcmp.eq.s32.totalorder %v469, %v848
    %vm859 = vcmp.eq.s32.totalorder %v469, %v851
    %vm860 = vcmp.eq.s32.totalorder %v469, %v854
    %v861 = vsel %vm855, 1, 0
    %v862 = vsel %vm856, 1, 0
    %v863 = vsel %vm857, 1, 0
    %v864 = vsel %vm858, 1, 0
    %v865 = vsel %vm859, 1, 0
    %v866 = vsel %vm860, 1, 0
    %v867 = vcvt.s32.f32 %v861
    %v868 = vcvt.s32.f32 %v862
    %v869 = vcvt.s32.f32 %v863
    %v870 = vcvt.s32.f32 %v864
    %v871 = vcvt.s32.f32 %v865
    %v872 = vcvt.s32.f32 %v866
    %v873 = vld [vmem:[#allocation2] sm:$0xff]
    %v874 = vld [vmem:[#allocation2 + $0x8] sm:$0xff]
    %v875 = vld [vmem:[#allocation2 + $0x10] sm:$0xff]
    %v876 = vld [vmem:[#allocation2 + $0x18] sm:$0xff]
    %v877 = vld [vmem:[#allocation2 + $0x20] sm:$0xff]
    %v878 = vld [vmem:[#allocation2 + $0x28] sm:$0xff]
    %vm879 = vcmask 195584
    %v881 = vsel %vm879, %v867, 0
    %v884 = vsel %vm879, %v868, 0
    %v887 = vsel %vm879, %v869, 0
    %v890 = vsel %vm879, %v870, 0
    %v893 = vsel %vm879, %v871, 0
    %v896 = vsel %vm879, %v872, 0
    %898 = vmatprep.subr.mxu0 0.0
    %899 = vmatpush1.msra.mxu0 0.0
    %900 = vmatprep.subr.mxu0 0.0
    %901 = vmatpush1.msra.mxu0 0.0
    %902 = vmatprep.subr.mxu0 0.0
    %903 = vmatpush1.msra.mxu0 0.0
    %904 = vmatprep.subr.mxu0 0.0
    %905 = vmatpush1.msra.mxu0 0.0
    %906 = vmatprep.subr.mxu0 0.0
    %907 = vmatpush1.msra.mxu0 0.0
    %908 = vmatprep.subr.mxu0 0.0
    %909 = vmatpush1.msra.mxu0 0.0
    %910 = vmatprep.subr.mxu0 0.0
    %911 = vmatpush1.msra.mxu0 0.0
    %912 = vmatprep.subr.mxu0 0.0
    %913 = vmatpush1.msra.mxu0 0.0
    %914 = vmatprep.subr.mxu0 0.0
    %915 = vmatpush1.msra.mxu0 0.0
    %916 = vmatprep.subr.mxu0 0.0
    %917 = vmatpush1.msra.mxu0 0.0
    %918 = vmatprep.subr.mxu0 0.0
    %919 = vmatpush1.msra.mxu0 0.0
    %920 = vmatprep.subr.mxu0 0.0
    %921 = vmatpush1.msra.mxu0 0.0
    %922 = vmatprep.subr.mxu0 0.0
    %923 = vmatpush1.msra.mxu0 0.0
    %924 = vmatprep.subr.mxu0 %v878
    %925 = vmatpush1.msra.mxu0 %v877
    %926 = vmatprep.subr.mxu0 %v876
    %927 = vmatpush1.msra.mxu0 %v875
    %928 = vmatprep.subr.mxu0 %v874
    %929 = vmatpush1.msra.mxu0 %v873
    %930 = vmatprep.subr.mxu0 0.0
    %931 = vmatpush2.msra.mxu0 0.0
    %932 = vmatprep.subr.mxu0 0.0
    %933 = vmatpush2.msra.mxu0 0.0
    %934 = vmatprep.subr.mxu0 0.0
    %935 = vmatpush2.msra.mxu0 0.0
    %936 = vmatprep.subr.mxu0 0.0
    %937 = vmatpush2.msra.mxu0 0.0
    %938 = vmatprep.subr.mxu0 0.0
    %939 = vmatpush2.msra.mxu0 0.0
    %940 = vmatprep.subr.mxu0 0.0
    %941 = vmatpush2.msra.mxu0 0.0
    %942 = vmatprep.subr.mxu0 0.0
    %943 = vmatpush2.msra.mxu0 0.0
    %944 = vmatprep.subr.mxu0 0.0
    %945 = vmatpush2.msra.mxu0 0.0
    %946 = vmatprep.subr.mxu0 0.0
    %947 = vmatpush2.msra.mxu0 0.0
    %948 = vmatprep.subr.mxu0 0.0
    %949 = vmatpush2.msra.mxu0 0.0
    %950 = vmatprep.subr.mxu0 0.0
    %951 = vmatpush2.msra.mxu0 0.0
    %952 = vmatprep.subr.mxu0 0.0
    %953 = vmatpush2.msra.mxu0 0.0
    %954 = vmatprep.subr.mxu0 0.0
    %955 = vmatpush2.msra.mxu0 0.0
    %956 = vmatprep.subr.mxu0 0.0
    %957 = vmatpush2.msra.mxu0 0.0
    %958 = vmatprep.subr.mxu0 0.0
    %959 = vmatpush2.msra.mxu0 0.0
    %960 = vmatprep.subr.mxu0 0.0
    %961 = vmatpush2.msra.mxu0 0.0
    %962 = vmatprep.mubr.f32.mxu0 0.0
    %963 = vmatmul.mubr.f32.gmra.mxu0 %v881
    %v964 = vpop.f32.mrf.mxu0
    %v965 = vadd.f32 0.0, %v964
    %v966 = vpop.f32.mrf.mxu0
    %967 = vmatprep.mubr.f32.mxu0 0.0
    %968 = vmatmul.mubr.f32.gmra.mxu0 %v884
    %v969 = vpop.f32.mrf.mxu0
    %v970 = vadd.f32 0.0, %v969
    %v971 = vpop.f32.mrf.mxu0
    %972 = vmatprep.mubr.f32.mxu0 0.0
    %973 = vmatmul.mubr.f32.gmra.mxu0 %v887
    %v974 = vpop.f32.mrf.mxu0
    %v975 = vadd.f32 0.0, %v974
    %v976 = vpop.f32.mrf.mxu0
    %977 = vmatprep.mubr.f32.mxu0 0.0
    %978 = vmatmul.mubr.f32.gmra.mxu0 %v890
    %v979 = vpop.f32.mrf.mxu0
    %v980 = vpop.f32.mrf.mxu0
    %v981 = vadd.f32 0.0, %v980
    %982 = vmatprep.mubr.f32.mxu0 0.0
    %983 = vmatmul.mubr.f32.gmra.mxu0 %v893
    %v984 = vpop.f32.mrf.mxu0
    %v985 = vpop.f32.mrf.mxu0
    %v986 = vadd.f32 0.0, %v985
    %987 = vmatprep.mubr.f32.mxu0 0.0
    %988 = vmatmul.mubr.f32.gmra.mxu0 %v896
    %v989 = vpop.f32.mrf.mxu0
    %v990 = vpop.f32.mrf.mxu0
    %v991 = vadd.f32 0.0, %v990
    %992 = vdwg.mxu0
    %v993 = vmax.f32 %v965, %v970
    %v994 = vmax.f32 %v993, %v975
    %v995 = vsub.f32 %v965, %v994
    %v996 = vmul.f32 %v995, 1.442695
    %v997 = vpow.pop %v996
    %v998 = vsub.f32 %v970, %v994
    %v999 = vmul.f32 %v998, 1.442695
    %v1000 = vpow.pop %v999
    %v1001 = vsub.f32 %v975, %v994
    %v1002 = vmul.f32 %v1001, 1.442695
    %v1003 = vpow.pop %v1002
    %v1004 = vadd.f32 %v997, %v1000
    %v1005 = vadd.f32 %v1004, %v1003
    %v1006 = vmul.f32 %v997, %v965
    %v1007 = vmul.f32 %v1000, %v970
    %v1008 = vadd.f32 %v1006, %v1007
    %v1009 = vmul.f32 %v1003, %v975
    %v1010 = vadd.f32 %v1008, %v1009
    %v1011 = vrcp.pop %v1005
    %v1012 = vmul.f32 %v1010, %v1011
    %v1013 = vmax.f32 %v1012, 0.0
    %1014 = vst [vmem:[#allocation2 + $0x30] sm:$0xff] %v1013
    %v1015 = vld [vmem:[#allocation3 + $0x20] sm:$0xff]
    %v1016 = vld [vmem:[%s3] sm:$0xff]
    %v1017 = vld [vmem:[%s3 + $0x8] sm:$0xff]
    %v1018 = vld [vmem:[%s3 + $0x10] sm:$0xff]
    %1020 = vset.pattern.permute.xlu0 0
    %1021 = vperm.xlu0 %1020, %v1016
    %v1022 = vpop.permute.xlu0 %1021
    %1025 = vset.pattern.permute.xlu0 0
    %1026 = vperm.xlu0 %1025, %v1017
    %v1027 = vpop.permute.xlu0 %1026
    %1030 = vset.pattern.permute.xlu0 0
    %1031 = vperm.xlu0 %1030, %v1018
    %v1032 = vpop.permute.xlu0 %1031
    %v1034 = vmul.f32 %v1022, %v672
    %v1035 = vmul.f32 %v1027, %v672
    %v1036 = vmul.f32 %v1032, %v672
    %v1037 = vadd.f32 %v981, %v1034
    %v1038 = vadd.f32 %v986, %v1035
    %v1039 = vadd.f32 %v991, %v1036
    %v1040 = vadd.f32 %v1037, %v1015
    %vm1041 = vcmp.gt.f32.partialorder %v1040, 0.0
    %v1042 = vmul.f32 %v1040, 0.2
    %v1043 = vsel %vm1041, %v1040, %v1042
    %v1044 = vadd.f32 %v1038, %v1015
    %vm1045 = vcmp.gt.f32.partialorder %v1044, 0.0
    %v1046 = vmul.f32 %v1044, 0.2
    %v1047 = vsel %vm1045, %v1044, %v1046
    %v1048 = vadd.f32 %v1039, %v1015
    %vm1049 = vcmp.gt.f32.partialorder %v1048, 0.0
    %v1050 = vmul.f32 %v1048, 0.2
    %v1051 = vsel %vm1049, %v1048, %v1050
    %v1052 = vmax.f32 %v1043, %v1047
    %v1053 = vmax.f32 %v1052, %v1051
    %v1054 = vsub.f32 %v1043, %v1053
    %v1055 = vmul.f32 %v1054, 1.442695
    %v1056 = vpow.pop %v1055
    %v1057 = vsub.f32 %v1047, %v1053
    %v1058 = vmul.f32 %v1057, 1.442695
    %v1059 = vpow.pop %v1058
    %v1060 = vsub.f32 %v1051, %v1053
    %v1061 = vmul.f32 %v1060, 1.442695
    %v1062 = vpow.pop %v1061
    %v1063 = vadd.f32 %v1056, %v1059
    %v1064 = vadd.f32 %v1063, %v1062
    %1066 = vset.pattern.permute.xlu0 32
    %1067 = vperm.xlu0 %1066, %v1056
    %v1068 = vpop.permute.xlu0 %1067
    %v1070 = vmul.f32 %v1068, %v1040
    %1072 = vset.pattern.permute.xlu0 32
    %1073 = vperm.xlu0 %1072, %v1059
    %v1074 = vpop.permute.xlu0 %1073
    %v1076 = vmul.f32 %v1074, %v1044
    %v1077 = vadd.f32 %v1070, %v1076
    %1079 = vset.pattern.permute.xlu0 32
    %1080 = vperm.xlu0 %1079, %v1062
    %v1081 = vpop.permute.xlu0 %1080
    %v1083 = vmul.f32 %v1081, %v1048
    %v1084 = vadd.f32 %v1077, %v1083
    %1086 = vset.pattern.permute.xlu0 32
    %1087 = vperm.xlu0 %1086, %v1064
    %v1088 = vpop.permute.xlu0 %1087
    %v1090 = vrcp.pop %v1088
    %v1091 = vmul.f32 %v1084, %v1090
    %v1092 = vmax.f32 %v1091, 0.0
    %v1093 = vsel %vm732, %v1092, 0.0
    %1094 = vst [vmem:[#allocation2 + $0x40] sm:$0xff] %v1093
    %v1095 = vld [vmem:[#allocation2 + $0x40] sm:$0xff]
    %v1096 = vld [vmem:[#allocation6] sm:$0xff]
    %v1097 = vld [vmem:[#allocation6 + $0x8] sm:$0xff]
    %v1098 = vld [vmem:[#allocation6 + $0x10] sm:$0xff]
    %v1099 = vld [vmem:[#allocation6 + $0x18] sm:$0xff]
    %v1100 = vld [vmem:[#allocation6 + $0x20] sm:$0xff]
    %v1101 = vld [vmem:[#allocation6 + $0x28] sm:$0xff]
    %v1102 = vld [vmem:[#allocation6 + $0x30] sm:$0xff]
    %v1103 = vld [vmem:[#allocation6 + $0x38] sm:$0xff]
    %v1104 = vld [vmem:[#allocation6 + $0x40] sm:$0xff]
    %v1105 = vld [vmem:[#allocation6 + $0x48] sm:$0xff]
    %v1106 = vld [vmem:[#allocation6 + $0x50] sm:$0xff]
    %v1107 = vld [vmem:[#allocation6 + $0x58] sm:$0xff]
    %v1108 = vld [vmem:[#allocation6 + $0x60] sm:$0xff]
    %v1109 = vld [vmem:[#allocation6 + $0x68] sm:$0xff]
    %v1110 = vld [vmem:[#allocation6 + $0x70] sm:$0xff]
    %v1111 = vld [vmem:[#allocation6 + $0x78] sm:$0xff]
    %v1112 = vld [vmem:[%s16] sm:$0x1]
    %v1114 = vlaneseq
    %v1115 = vshrl.u32 %v1114, 7
    %v1116 = vsub.s32 0, %v1115
    %v1117 = vrot.slane %v1112, %v1116
    %1119 = vmatprep.subr.mxu0 0.0
    %1120 = vmatpush1.msra.mxu0 %v1111
    %1121 = vmatprep.subr.mxu0 0.0
    %1122 = vmatpush1.msra.mxu0 %v1110
    %1123 = vmatprep.subr.mxu0 0.0
    %1124 = vmatpush1.msra.mxu0 %v1109
    %1125 = vmatprep.subr.mxu0 0.0
    %1126 = vmatpush1.msra.mxu0 %v1108
    %1127 = vmatprep.subr.mxu0 0.0
    %1128 = vmatpush1.msra.mxu0 %v1107
    %1129 = vmatprep.subr.mxu0 0.0
    %1130 = vmatpush1.msra.mxu0 %v1106
    %1131 = vmatprep.subr.mxu0 0.0
    %1132 = vmatpush1.msra.mxu0 %v1105
    %1133 = vmatprep.subr.mxu0 0.0
    %1134 = vmatpush1.msra.mxu0 %v1104
    %1135 = vmatprep.subr.mxu0 0.0
    %1136 = vmatpush1.msra.mxu0 %v1103
    %1137 = vmatprep.subr.mxu0 0.0
    %1138 = vmatpush1.msra.mxu0 %v1102
    %1139 = vmatprep.subr.mxu0 0.0
    %1140 = vmatpush1.msra.mxu0 %v1101
    %1141 = vmatprep.subr.mxu0 0.0
    %1142 = vmatpush1.msra.mxu0 %v1100
    %1143 = vmatprep.subr.mxu0 0.0
    %1144 = vmatpush1.msra.mxu0 %v1099
    %1145 = vmatprep.subr.mxu0 0.0
    %1146 = vmatpush1.msra.mxu0 %v1098
    %1147 = vmatprep.subr.mxu0 0.0
    %1148 = vmatpush1.msra.mxu0 %v1097
    %1149 = vmatprep.subr.mxu0 0.0
    %1150 = vmatpush1.msra.mxu0 %v1096
    %1151 = vmatprep.subr.mxu0 0.0
    %1152 = vmatpush2.msra.mxu0 0.0
    %1153 = vmatprep.subr.mxu0 0.0
    %1154 = vmatpush2.msra.mxu0 0.0
    %1155 = vmatprep.subr.mxu0 0.0
    %1156 = vmatpush2.msra.mxu0 0.0
    %1157 = vmatprep.subr.mxu0 0.0
    %1158 = vmatpush2.msra.mxu0 0.0
    %1159 = vmatprep.subr.mxu0 0.0
    %1160 = vmatpush2.msra.mxu0 0.0
    %1161 = vmatprep.subr.mxu0 0.0
    %1162 = vmatpush2.msra.mxu0 0.0
    %1163 = vmatprep.subr.mxu0 0.0
    %1164 = vmatpush2.msra.mxu0 0.0
    %1165 = vmatprep.subr.mxu0 0.0
    %1166 = vmatpush2.msra.mxu0 0.0
    %1167 = vmatprep.subr.mxu0 0.0
    %1168 = vmatpush2.msra.mxu0 0.0
    %1169 = vmatprep.subr.mxu0 0.0
    %1170 = vmatpush2.msra.mxu0 0.0
    %1171 = vmatprep.subr.mxu0 0.0
    %1172 = vmatpush2.msra.mxu0 0.0
    %1173 = vmatprep.subr.mxu0 0.0
    %1174 = vmatpush2.msra.mxu0 0.0
    %1175 = vmatprep.subr.mxu0 0.0
    %1176 = vmatpush2.msra.mxu0 0.0
    %1177 = vmatprep.subr.mxu0 0.0
    %1178 = vmatpush2.msra.mxu0 0.0
    %1179 = vmatprep.subr.mxu0 0.0
    %1180 = vmatpush2.msra.mxu0 0.0
    %1181 = vmatprep.subr.mxu0 0.0
    %1182 = vmatpush2.msra.mxu0 0.0
    %1183 = vmatprep.mubr.f32.mxu0 0.0
    %1184 = vmatmul.mubr.f32.gmra.mxu0 %v1095
    %v1185 = vpop.f32.mrf.mxu0
    %v1186 = vadd.f32 %v1117, %v1185
    %v1187 = vpop.f32.mrf.mxu0
    %1188 = vdwg.mxu0
    %vm1189 = vcmp.gt.f32.partialorder %v1186, 0.0
    %v1190 = vmul.f32 %v1186, 0.1
    %v1191 = vsel %vm1189, %v1186, %v1190
    %v1192 = vld [vmem:[#allocation8] sm:$0xff]
    %v1193 = vld [vmem:[#allocation8 + $0x8] sm:$0xff]
    %v1194 = vld [vmem:[#allocation8 + $0x10] sm:$0xff]
    %v1195 = vld [vmem:[#allocation8 + $0x18] sm:$0xff]
    %v1196 = vld [vmem:[#allocation8 + $0x20] sm:$0xff]
    %v1197 = vld [vmem:[#allocation8 + $0x28] sm:$0xff]
    %v1198 = vld [vmem:[#allocation8 + $0x30] sm:$0xff]
    %v1199 = vld [vmem:[#allocation8 + $0x38] sm:$0xff]
    %v1200 = vld [vmem:[#allocation8 + $0x40] sm:$0xff]
    %v1201 = vld [vmem:[#allocation8 + $0x48] sm:$0xff]
    %v1202 = vld [vmem:[#allocation8 + $0x50] sm:$0xff]
    %v1203 = vld [vmem:[#allocation8 + $0x58] sm:$0xff]
    %v1204 = vld [vmem:[#allocation8 + $0x60] sm:$0xff]
    %v1205 = vld [vmem:[#allocation8 + $0x68] sm:$0xff]
    %v1206 = vld [vmem:[#allocation8 + $0x70] sm:$0xff]
    %v1207 = vld [vmem:[#allocation8 + $0x78] sm:$0xff]
    %v1208 = vld [vmem:[%s18] sm:$0x1]
    %v1210 = vlaneseq
    %v1211 = vshrl.u32 %v1210, 7
    %v1212 = vsub.s32 0, %v1211
    %v1213 = vrot.slane %v1208, %v1212
    %1215 = vmatprep.subr.mxu0 0.0
    %1216 = vmatpush1.msra.mxu0 %v1207
    %1217 = vmatprep.subr.mxu0 0.0
    %1218 = vmatpush1.msra.mxu0 %v1206
    %1219 = vmatprep.subr.mxu0 0.0
    %1220 = vmatpush1.msra.mxu0 %v1205
    %1221 = vmatprep.subr.mxu0 0.0
    %1222 = vmatpush1.msra.mxu0 %v1204
    %1223 = vmatprep.subr.mxu0 0.0
    %1224 = vmatpush1.msra.mxu0 %v1203
    %1225 = vmatprep.subr.mxu0 0.0
    %1226 = vmatpush1.msra.mxu0 %v1202
    %1227 = vmatprep.subr.mxu0 0.0
    %1228 = vmatpush1.msra.mxu0 %v1201
    %1229 = vmatprep.subr.mxu0 0.0
    %1230 = vmatpush1.msra.mxu0 %v1200
    %1231 = vmatprep.subr.mxu0 0.0
    %1232 = vmatpush1.msra.mxu0 %v1199
    %1233 = vmatprep.subr.mxu0 0.0
    %1234 = vmatpush1.msra.mxu0 %v1198
    %1235 = vmatprep.subr.mxu0 0.0
    %1236 = vmatpush1.msra.mxu0 %v1197
    %1237 = vmatprep.subr.mxu0 0.0
    %1238 = vmatpush1.msra.mxu0 %v1196
    %1239 = vmatprep.subr.mxu0 0.0
    %1240 = vmatpush1.msra.mxu0 %v1195
    %1241 = vmatprep.subr.mxu0 0.0
    %1242 = vmatpush1.msra.mxu0 %v1194
    %1243 = vmatprep.subr.mxu0 0.0
    %1244 = vmatpush1.msra.mxu0 %v1193
    %1245 = vmatprep.subr.mxu0 0.0
    %1246 = vmatpush1.msra.mxu0 %v1192
    %1247 = vmatprep.subr.mxu0 0.0
    %1248 = vmatpush2.msra.mxu0 0.0
    %1249 = vmatprep.subr.mxu0 0.0
    %1250 = vmatpush2.msra.mxu0 0.0
    %1251 = vmatprep.subr.mxu0 0.0
    %1252 = vmatpush2.msra.mxu0 0.0
    %1253 = vmatprep.subr.mxu0 0.0
    %1254 = vmatpush2.msra.mxu0 0.0
    %1255 = vmatprep.subr.mxu0 0.0
    %1256 = vmatpush2.msra.mxu0 0.0
    %1257 = vmatprep.subr.mxu0 0.0
    %1258 = vmatpush2.msra.mxu0 0.0
    %1259 = vmatprep.subr.mxu0 0.0
    %1260 = vmatpush2.msra.mxu0 0.0
    %1261 = vmatprep.subr.mxu0 0.0
    %1262 = vmatpush2.msra.mxu0 0.0
    %1263 = vmatprep.subr.mxu0 0.0
    %1264 = vmatpush2.msra.mxu0 0.0
    %1265 = vmatprep.subr.mxu0 0.0
    %1266 = vmatpush2.msra.mxu0 0.0
    %1267 = vmatprep.subr.mxu0 0.0
    %1268 = vmatpush2.msra.mxu0 0.0
    %1269 = vmatprep.subr.mxu0 0.0
    %1270 = vmatpush2.msra.mxu0 0.0
    %1271 = vmatprep.subr.mxu0 0.0
    %1272 = vmatpush2.msra.mxu0 0.0
    %1273 = vmatprep.subr.mxu0 0.0
    %1274 = vmatpush2.msra.mxu0 0.0
    %1275 = vmatprep.subr.mxu0 0.0
    %1276 = vmatpush2.msra.mxu0 0.0
    %1277 = vmatprep.subr.mxu0 0.0
    %1278 = vmatpush2.msra.mxu0 0.0
    %1279 = vmatprep.mubr.f32.mxu0 0.0
    %1280 = vmatmul.mubr.f32.gmra.mxu0 %v1191
    %v1281 = vpop.f32.mrf.mxu0
    %v1282 = vadd.f32 %v1213, %v1281
    %v1283 = vpop.f32.mrf.mxu0
    %1284 = vdwg.mxu0
    %1285 = vst [vmem:[%s19] sm:$0xff] %v1282
    // Predicated region
    $region90: #{forward.1} parent=1 // pred_check
      _
    $region91: #{forward.1} parent=1 // pred_check_branch
      %1287 = sbr.rel (0) target = $region93
    $region92: #{forward.1} parent=1 // pred_region
      _
    $region93: #{forward.1} parent=1 // pred_fallthru
      _
    // Predicated region
    $region94: #{forward.1} parent=1 // pred_check
      _
    $region95: #{forward.1} parent=1 // pred_check_branch
      %1289 = sbr.rel (0) target = $region97
    $region96: #{forward.1} parent=1 // pred_region
      _
    $region97: #{forward.1} parent=1 // pred_fallthru
      _
    %1290 = vsyncpa [#allocation5], 1
    %1291 = vsyncpa [#allocation7], 1

</llo_original>
